<compile_context>
chip_gen: v6e
topology: v6e:2x2x1
jax: 0.10.0
libtpu: 0.0.40
codegen_flags: <defaults>
</compile_context>

<pallas_src>
import functools

import jax
import jax.numpy as jnp
from jax import lax
from jax.experimental import pallas as pl
from jax.experimental.pallas import tpu as pltpu

STRIDE, PAD = 2, 1
NEG_SLOPE = 0.2
COMPUTE_DTYPE = jnp.bfloat16     # HBM activations / MXU inputs (accum is f32)
LANE = 128
TM_MAX = 512                     # flattened output positions per grid step


def _round_up(v, m):
    return (v + m - 1) // m * m


def _conv_s2d_kernel(x_ref, w_ref, o_ref, *, ws, win, apply_act):
    """4x4/s2/p1 conv expressed as a 2x2/s1 conv on the space-to-depth input.

    x_ref: (1, Mi, C4)  bf16  row-major flattened s2d image (zero-padded rows)
    w_ref: (4, C4, Np)  bf16  tap weights, VMEM-resident for the whole grid
    o_ref: (1, tm, Np)        one band of flattened output positions
    """
    tm = o_ref.shape[1]
    base = pl.multiple_of(pl.program_id(1) * tm, 16)       # bf16-tile aligned
    # One aligned window load; stage in f32 so the odd-offset tap shifts are
    # plain 32-bit sublane relayouts entirely inside VMEM.
    xw = x_ref[0, pl.ds(base, win), :].astype(jnp.float32)
    acc = None
    for idx, shift in enumerate((0, 1, ws, ws + 1)):        # (rh, rw) taps
        a = xw[shift:shift + tm, :].astype(x_ref.dtype)
        part = jnp.dot(a, w_ref[idx], preferred_element_type=jnp.float32)
        acc = part if acc is None else acc + part
    if apply_act:
        acc = jnp.where(acc >= 0, acc, NEG_SLOPE * acc)
    o_ref[0] = acc.astype(o_ref.dtype)


def _conv_layer(x_nhwc, w, apply_act, out_dtype):
    """One Conv2d(k=4, s=2, p=1, bias=False) [+ LeakyReLU(0.2)] layer.

    x_nhwc: (B, H, W, Cin); w: (Cout, Cin, 4, 4) in PyTorch OIHW order.
    Returns (B, H//2, W//2, Cout) in out_dtype.
    """
    B, H, W, Cin = x_nhwc.shape
    Cout = w.shape[0]
    assert H % 2 == 0 and W % 2 == 0, "even spatial dims required"
    Ho, Wo = H // 2, W // 2
    Hs, Ws = Ho + 1, Wo + 1
    C4 = 4 * Cin

    # ---- pad(1) + space-to-depth(2) + flatten: one fused XLA copy (~1x) ----
    xp = jnp.pad(x_nhwc, ((0, 0), (PAD, PAD), (PAD, PAD), (0, 0)))
    xs = xp.reshape(B, Hs, 2, Ws, 2, Cin)
    xs = jnp.transpose(xs, (0, 1, 3, 2, 4, 5)).reshape(B, Hs * Ws, C4)

    M_out = Ho * Ws                   # valid rows; column j == Ws-1 discarded
    tm = min(TM_MAX, _round_up(M_out, 16))
    M_out_p = _round_up(M_out, tm)
    win = _round_up(tm + Ws + 1, 8)   # window rows a band needs (incl. taps)
    Mi = _round_up(M_out_p - tm + win, 16)
    xs = jnp.pad(xs, ((0, 0), (0, Mi - Hs * Ws), (0, 0))).astype(COMPUTE_DTYPE)

    # ---- weights: OIHW -> (rh*2+rw, (dh*2+dw)*Cin + cin, cout); N -> x128 ---
    Np = _round_up(Cout, LANE)
    w2 = w.reshape(Cout, Cin, 2, 2, 2, 2)           # (co, ci, rh, dh, rw, dw)
    w2 = jnp.transpose(w2, (2, 4, 3, 5, 1, 0)).reshape(4, C4, Cout)
    if Np != Cout:
        w2 = jnp.pad(w2, ((0, 0), (0, 0), (0, Np - Cout)))
    w2 = w2.astype(COMPUTE_DTYPE)

    n_bands = M_out_p // tm
    grid = (B, n_bands)
    out_isz = jnp.dtype(out_dtype).itemsize

    # VMEM: double-buffered blocks + in-kernel f32 staging & accumulator.
    # TODO(synk): for very large images band the x HBM block itself (manual
    # overlapping-row DMA) instead of keeping the whole s2d image resident.
    vmem_needed = (2 * Mi * C4 * 2 + 2 * 4 * C4 * Np * 2
                   + 2 * tm * Np * out_isz + win * C4 * 4 + 2 * tm * Np * 4)
    vmem_limit = int(min(vmem_needed + (16 << 20), 48 << 20))

    cost = pl.CostEstimate(
        flops=int(2 * B * M_out_p * (4 * C4) * Np),
        transcendentals=0,
        bytes_accessed=int(B * Mi * C4 * 2 + 4 * C4 * Np * 2
                           + B * M_out_p * Np * out_isz),
    )

    out = pl.pallas_call(
        functools.partial(_conv_s2d_kernel, ws=Ws, win=win, apply_act=apply_act),
        out_shape=jax.ShapeDtypeStruct((B, M_out_p, Np), out_dtype),
        grid=grid,
        in_specs=[
            pl.BlockSpec((1, Mi, C4), lambda b, m: (b, 0, 0)),   # 1 DMA / image
            pl.BlockSpec((4, C4, Np), lambda b, m: (0, 0, 0)),   # resident W
        ],
        out_specs=pl.BlockSpec((1, tm, Np), lambda b, m: (b, m, 0)),
        compiler_params=pltpu.CompilerParams(
            dimension_semantics=("parallel", "parallel"),
            vmem_limit_bytes=vmem_limit,
        ),
        cost_estimate=cost,
    )(xs, w2)

    # Drop throwaway column / row / channel padding; these slices fuse into
    # the next layer's pad + space-to-depth copy (or the final flatten).
    out = out[:, :M_out, :Cout].reshape(B, Ho, Ws, Cout)[:, :, :Wo, :]
    return out


def init_params(key, ndf):
    k1, k2, k3 = jax.random.split(key, 3)
    w1 = 0.05 * jax.random.normal(k1, (ndf * 2, 3, 4, 4), jnp.float32)
    w2 = 0.05 * jax.random.normal(k2, (ndf * 4, ndf * 2, 4, 4), jnp.float32)
    w3 = 0.05 * jax.random.normal(k3, (ndf * 8, ndf * 4, 4, 4), jnp.float32)
    return w1, w2, w3


@jax.jit
def discriminator_forward(x, params):
    """x: (B, 3, H, W) NCHW (PyTorch layout) -> (B, ndf*8*(H//8)*(W//8))."""
    w1, w2, w3 = params
    h = jnp.transpose(x, (0, 2, 3, 1))                       # NCHW -> NHWC once
    h = _conv_layer(h, w1, apply_act=True, out_dtype=COMPUTE_DTYPE)
    h = _conv_layer(h, w2, apply_act=True, out_dtype=COMPUTE_DTYPE)
    h = _conv_layer(h, w3, apply_act=False, out_dtype=jnp.float32)
    # PyTorch .view(B, -1) flattens in NCHW order; do it on the tiny final map.
    return jnp.transpose(h, (0, 3, 1, 2)).reshape(x.shape[0], -1)


def _reference_forward(x, params):
    # Pure-JAX f32 reference for verification.
    def conv(x, w):
        return lax.conv_general_dilated(
            x, w, window_strides=(STRIDE, STRIDE),
            padding=((PAD, PAD), (PAD, PAD)),
            dimension_numbers=("NCHW", "OIHW", "NCHW"))

    def lrelu(v):
        return jnp.where(v >= 0, v, NEG_SLOPE * v)

    w1, w2, w3 = params
    h = lrelu(conv(x, w1))
    h = lrelu(conv(h, w2))
    h = conv(h, w3)
    return h.reshape(x.shape[0], -1)


if __name__ == "__main__":
    key = jax.random.PRNGKey(0)
    kx, kp = jax.random.split(key)

    batch, ndf, spatial = 2, 8, 16   # 3x16x16 inputs -> (B, ndf*8*2*2)
    x = jax.random.normal(kx, (batch, 3, spatial, spatial), jnp.float32)
    params = init_params(kp, ndf)

    out = jax.block_until_ready(discriminator_forward(x, params))
    ref = jax.block_until_ready(_reference_forward(x, params))

    assert out.shape == (batch, ndf * 8 * (spatial // 8) ** 2), out.shape
    max_err = float(jnp.max(jnp.abs(out - ref)))
    # bf16 activations / MXU inputs with f32 accumulation -> relaxed tolerance.
    assert jnp.allclose(out, ref, atol=5e-2, rtol=5e-2), (
        "mismatch vs reference, max abs err = %f" % max_err)

    print("KERNEL_OK")
</pallas_src>

<mosaic_0001>
module attributes {stable_mosaic.version = 11 : i64} {
  func.func @_conv_s2d_kernel(%arg0: i32, %arg1: i32, %arg2: memref<1x96x12xbf16, #tpu.memory_space<vmem>>, %arg3: memref<4x12x128xbf16, #tpu.memory_space<vmem>>, %arg4: memref<1x80x128xbf16, #tpu.memory_space<vmem>>) attributes {dimension_semantics = [#tpu.dimension_semantics<parallel>, #tpu.dimension_semantics<parallel>], iteration_bounds = array<i64: 2, 1>, scalar_prefetch = 0 : i64, scratch_operands = 0 : i64, tpu.core_type = #tpu.core_type<tc>, window_params = [{transform_indices = @transform_0, window_bounds = array<i64: 1, 96, 12>}, {pipeline_mode = #tpu.pipeline_mode<synchronous>, transform_indices = @transform_1, window_bounds = array<i64: 4, 12, 128>}, {transform_indices = @transform_2, window_bounds = array<i64: 1, 80, 128>}]} {
    %c80_i32 = arith.constant 80 : i32
    %0 = arith.muli %arg1, %c80_i32 : i32
    %1 = tpu.assume_multiple %0, 16 : i32
    %c0 = arith.constant 0 : index
    %2 = arith.index_cast %1 : i32 to index
    %c0_0 = arith.constant 0 : index
    %3 = vector.load %arg2[%c0, %2, %c0_0] : memref<1x96x12xbf16, #tpu.memory_space<vmem>>, vector<1x96x12xbf16>
    %4 = vector.shape_cast %3 : vector<1x96x12xbf16> to vector<96x12xbf16>
    %5 = arith.extf %4 : vector<96x12xbf16> to vector<96x12xf32>
    %6 = vector.extract_strided_slice %5 {offsets = [0, 0], sizes = [80, 12], strides = [1, 1]} : vector<96x12xf32> to vector<80x12xf32>
    %7 = arith.truncf %6 : vector<80x12xf32> to vector<80x12xbf16>
    %c0_1 = arith.constant 0 : index
    %c0_2 = arith.constant 0 : index
    %c0_3 = arith.constant 0 : index
    %8 = vector.load %arg3[%c0_1, %c0_2, %c0_3] : memref<4x12x128xbf16, #tpu.memory_space<vmem>>, vector<1x12x128xbf16>
    %9 = vector.shape_cast %8 : vector<1x12x128xbf16> to vector<12x128xbf16>
    %cst = arith.constant dense<0.000000e+00> : vector<80x128xf32>
    %10 = tpu.matmul %7, %9, %cst {dimension_numbers = #tpu.dot_dimension_numbers<[1], [0], [0], [1], [0, 0, 1, 1], [], []>} : vector<80x12xbf16>, vector<12x128xbf16>, vector<80x128xf32> -> vector<80x128xf32>
    %11 = vector.extract_strided_slice %5 {offsets = [1, 0], sizes = [80, 12], strides = [1, 1]} : vector<96x12xf32> to vector<80x12xf32>
    %12 = arith.truncf %11 : vector<80x12xf32> to vector<80x12xbf16>
    %c1 = arith.constant 1 : index
    %c0_4 = arith.constant 0 : index
    %c0_5 = arith.constant 0 : index
    %13 = vector.load %arg3[%c1, %c0_4, %c0_5] : memref<4x12x128xbf16, #tpu.memory_space<vmem>>, vector<1x12x128xbf16>
    %14 = vector.shape_cast %13 : vector<1x12x128xbf16> to vector<12x128xbf16>
    %cst_6 = arith.constant dense<0.000000e+00> : vector<80x128xf32>
    %15 = tpu.matmul %12, %14, %cst_6 {dimension_numbers = #tpu.dot_dimension_numbers<[1], [0], [0], [1], [0, 0, 1, 1], [], []>} : vector<80x12xbf16>, vector<12x128xbf16>, vector<80x128xf32> -> vector<80x128xf32>
    %16 = arith.addf %10, %15 : vector<80x128xf32>
    %17 = vector.extract_strided_slice %5 {offsets = [9, 0], sizes = [80, 12], strides = [1, 1]} : vector<96x12xf32> to vector<80x12xf32>
    %18 = arith.truncf %17 : vector<80x12xf32> to vector<80x12xbf16>
    %c2 = arith.constant 2 : index
    %c0_7 = arith.constant 0 : index
    %c0_8 = arith.constant 0 : index
    %19 = vector.load %arg3[%c2, %c0_7, %c0_8] : memref<4x12x128xbf16, #tpu.memory_space<vmem>>, vector<1x12x128xbf16>
    %20 = vector.shape_cast %19 : vector<1x12x128xbf16> to vector<12x128xbf16>
    %cst_9 = arith.constant dense<0.000000e+00> : vector<80x128xf32>
    %21 = tpu.matmul %18, %20, %cst_9 {dimension_numbers = #tpu.dot_dimension_numbers<[1], [0], [0], [1], [0, 0, 1, 1], [], []>} : vector<80x12xbf16>, vector<12x128xbf16>, vector<80x128xf32> -> vector<80x128xf32>
    %22 = arith.addf %16, %21 : vector<80x128xf32>
    %23 = vector.extract_strided_slice %5 {offsets = [10, 0], sizes = [80, 12], strides = [1, 1]} : vector<96x12xf32> to vector<80x12xf32>
    %24 = arith.truncf %23 : vector<80x12xf32> to vector<80x12xbf16>
    %c3 = arith.constant 3 : index
    %c0_10 = arith.constant 0 : index
    %c0_11 = arith.constant 0 : index
    %25 = vector.load %arg3[%c3, %c0_10, %c0_11] : memref<4x12x128xbf16, #tpu.memory_space<vmem>>, vector<1x12x128xbf16>
    %26 = vector.shape_cast %25 : vector<1x12x128xbf16> to vector<12x128xbf16>
    %cst_12 = arith.constant dense<0.000000e+00> : vector<80x128xf32>
    %27 = tpu.matmul %24, %26, %cst_12 {dimension_numbers = #tpu.dot_dimension_numbers<[1], [0], [0], [1], [0, 0, 1, 1], [], []>} : vector<80x12xbf16>, vector<12x128xbf16>, vector<80x128xf32> -> vector<80x128xf32>
    %28 = arith.addf %22, %27 : vector<80x128xf32>
    %cst_13 = arith.constant 0.000000e+00 : f32
    %29 = vector.broadcast %cst_13 : f32 to vector<80x128xf32>
    %30 = arith.cmpf oge, %28, %29 : vector<80x128xf32>
    %cst_14 = arith.constant 2.000000e-01 : f32
    %31 = vector.broadcast %cst_14 : f32 to vector<80x128xf32>
    %32 = arith.mulf %31, %28 : vector<80x128xf32>
    %33 = arith.select %30, %28, %32 : vector<80x128xi1>, vector<80x128xf32>
    %34 = arith.truncf %33 : vector<80x128xf32> to vector<80x128xbf16>
    %c0_15 = arith.constant 0 : index
    %c0_16 = arith.constant 0 : index
    %c0_17 = arith.constant 0 : index
    %35 = vector.load %arg4[%c0_15, %c0_16, %c0_17] : memref<1x80x128xbf16, #tpu.memory_space<vmem>>, vector<1x80x128xbf16>
    %36 = vector.shape_cast %35 : vector<1x80x128xbf16> to vector<80x128xbf16>
    %37 = vector.shape_cast %34 : vector<80x128xbf16> to vector<1x80x128xbf16>
    tpu.vector_store %arg4[%c0_15, %c0_16, %c0_17], %37 {strides = array<i32>} : memref<1x80x128xbf16, #tpu.memory_space<vmem>>, vector<1x80x128xbf16>,
    return
  }
  func.func @transform_0(%arg0: i32, %arg1: i32) -> (i32, i32, i32) {
    %c0_i32 = arith.constant 0 : i32
    %c0_i32_0 = arith.constant 0 : i32
    %c0_i32_1 = arith.constant 0 : i32
    return %arg0, %c0_i32, %c0_i32_0 : i32, i32, i32
  }
  func.func @transform_1(%arg0: i32, %arg1: i32) -> (i32, i32, i32) {
    %c0_i32 = arith.constant 0 : i32
    %c0_i32_0 = arith.constant 0 : i32
    %c0_i32_1 = arith.constant 0 : i32
    %c0_i32_2 = arith.constant 0 : i32
    return %c0_i32, %c0_i32_0, %c0_i32_1 : i32, i32, i32
  }
  func.func @transform_2(%arg0: i32, %arg1: i32) -> (i32, i32, i32) {
    %c0_i32 = arith.constant 0 : i32
    %c0_i32_0 = arith.constant 0 : i32
    return %arg0, %arg1, %c0_i32 : i32, i32, i32
  }
}

module attributes {stable_mosaic.version = 11 : i64} {
  func.func @_conv_s2d_kernel(%arg0: i32, %arg1: i32, %arg2: memref<1x48x64xbf16, #tpu.memory_space<vmem>>, %arg3: memref<4x64x128xbf16, #tpu.memory_space<vmem>>, %arg4: memref<1x32x128xbf16, #tpu.memory_space<vmem>>) attributes {dimension_semantics = [#tpu.dimension_semantics<parallel>, #tpu.dimension_semantics<parallel>], iteration_bounds = array<i64: 2, 1>, scalar_prefetch = 0 : i64, scratch_operands = 0 : i64, tpu.core_type = #tpu.core_type<tc>, window_params = [{transform_indices = @transform_0, window_bounds = array<i64: 1, 48, 64>}, {pipeline_mode = #tpu.pipeline_mode<synchronous>, transform_indices = @transform_1, window_bounds = array<i64: 4, 64, 128>}, {transform_indices = @transform_2, window_bounds = array<i64: 1, 32, 128>}]} {
    %c32_i32 = arith.constant 32 : i32
    %0 = arith.muli %arg1, %c32_i32 : i32
    %1 = tpu.assume_multiple %0, 16 : i32
    %c0 = arith.constant 0 : index
    %2 = arith.index_cast %1 : i32 to index
    %c0_0 = arith.constant 0 : index
    %3 = vector.load %arg2[%c0, %2, %c0_0] : memref<1x48x64xbf16, #tpu.memory_space<vmem>>, vector<1x40x64xbf16>
    %4 = vector.shape_cast %3 : vector<1x40x64xbf16> to vector<40x64xbf16>
    %5 = arith.extf %4 : vector<40x64xbf16> to vector<40x64xf32>
    %6 = vector.extract_strided_slice %5 {offsets = [0, 0], sizes = [32, 64], strides = [1, 1]} : vector<40x64xf32> to vector<32x64xf32>
    %7 = arith.truncf %6 : vector<32x64xf32> to vector<32x64xbf16>
    %c0_1 = arith.constant 0 : index
    %c0_2 = arith.constant 0 : index
    %c0_3 = arith.constant 0 : index
    %8 = vector.load %arg3[%c0_1, %c0_2, %c0_3] : memref<4x64x128xbf16, #tpu.memory_space<vmem>>, vector<1x64x128xbf16>
    %9 = vector.shape_cast %8 : vector<1x64x128xbf16> to vector<64x128xbf16>
    %cst = arith.constant dense<0.000000e+00> : vector<32x128xf32>
    %10 = tpu.matmul %7, %9, %cst {dimension_numbers = #tpu.dot_dimension_numbers<[1], [0], [0], [1], [0, 0, 1, 1], [], []>} : vector<32x64xbf16>, vector<64x128xbf16>, vector<32x128xf32> -> vector<32x128xf32>
    %11 = vector.extract_strided_slice %5 {offsets = [1, 0], sizes = [32, 64], strides = [1, 1]} : vector<40x64xf32> to vector<32x64xf32>
    %12 = arith.truncf %11 : vector<32x64xf32> to vector<32x64xbf16>
    %c1 = arith.constant 1 : index
    %c0_4 = arith.constant 0 : index
    %c0_5 = arith.constant 0 : index
    %13 = vector.load %arg3[%c1, %c0_4, %c0_5] : memref<4x64x128xbf16, #tpu.memory_space<vmem>>, vector<1x64x128xbf16>
    %14 = vector.shape_cast %13 : vector<1x64x128xbf16> to vector<64x128xbf16>
    %cst_6 = arith.constant dense<0.000000e+00> : vector<32x128xf32>
    %15 = tpu.matmul %12, %14, %cst_6 {dimension_numbers = #tpu.dot_dimension_numbers<[1], [0], [0], [1], [0, 0, 1, 1], [], []>} : vector<32x64xbf16>, vector<64x128xbf16>, vector<32x128xf32> -> vector<32x128xf32>
    %16 = arith.addf %10, %15 : vector<32x128xf32>
    %17 = vector.extract_strided_slice %5 {offsets = [5, 0], sizes = [32, 64], strides = [1, 1]} : vector<40x64xf32> to vector<32x64xf32>
    %18 = arith.truncf %17 : vector<32x64xf32> to vector<32x64xbf16>
    %c2 = arith.constant 2 : index
    %c0_7 = arith.constant 0 : index
    %c0_8 = arith.constant 0 : index
    %19 = vector.load %arg3[%c2, %c0_7, %c0_8] : memref<4x64x128xbf16, #tpu.memory_space<vmem>>, vector<1x64x128xbf16>
    %20 = vector.shape_cast %19 : vector<1x64x128xbf16> to vector<64x128xbf16>
    %cst_9 = arith.constant dense<0.000000e+00> : vector<32x128xf32>
    %21 = tpu.matmul %18, %20, %cst_9 {dimension_numbers = #tpu.dot_dimension_numbers<[1], [0], [0], [1], [0, 0, 1, 1], [], []>} : vector<32x64xbf16>, vector<64x128xbf16>, vector<32x128xf32> -> vector<32x128xf32>
    %22 = arith.addf %16, %21 : vector<32x128xf32>
    %23 = vector.extract_strided_slice %5 {offsets = [6, 0], sizes = [32, 64], strides = [1, 1]} : vector<40x64xf32> to vector<32x64xf32>
    %24 = arith.truncf %23 : vector<32x64xf32> to vector<32x64xbf16>
    %c3 = arith.constant 3 : index
    %c0_10 = arith.constant 0 : index
    %c0_11 = arith.constant 0 : index
    %25 = vector.load %arg3[%c3, %c0_10, %c0_11] : memref<4x64x128xbf16, #tpu.memory_space<vmem>>, vector<1x64x128xbf16>
    %26 = vector.shape_cast %25 : vector<1x64x128xbf16> to vector<64x128xbf16>
    %cst_12 = arith.constant dense<0.000000e+00> : vector<32x128xf32>
    %27 = tpu.matmul %24, %26, %cst_12 {dimension_numbers = #tpu.dot_dimension_numbers<[1], [0], [0], [1], [0, 0, 1, 1], [], []>} : vector<32x64xbf16>, vector<64x128xbf16>, vector<32x128xf32> -> vector<32x128xf32>
    %28 = arith.addf %22, %27 : vector<32x128xf32>
    %cst_13 = arith.constant 0.000000e+00 : f32
    %29 = vector.broadcast %cst_13 : f32 to vector<32x128xf32>
    %30 = arith.cmpf oge, %28, %29 : vector<32x128xf32>
    %cst_14 = arith.constant 2.000000e-01 : f32
    %31 = vector.broadcast %cst_14 : f32 to vector<32x128xf32>
    %32 = arith.mulf %31, %28 : vector<32x128xf32>
    %33 = arith.select %30, %28, %32 : vector<32x128xi1>, vector<32x128xf32>
    %34 = arith.truncf %33 : vector<32x128xf32> to vector<32x128xbf16>
    %c0_15 = arith.constant 0 : index
    %c0_16 = arith.constant 0 : index
    %c0_17 = arith.constant 0 : index
    %35 = vector.load %arg4[%c0_15, %c0_16, %c0_17] : memref<1x32x128xbf16, #tpu.memory_space<vmem>>, vector<1x32x128xbf16>
    %36 = vector.shape_cast %35 : vector<1x32x128xbf16> to vector<32x128xbf16>
    %37 = vector.shape_cast %34 : vector<32x128xbf16> to vector<1x32x128xbf16>
    tpu.vector_store %arg4[%c0_15, %c0_16, %c0_17], %37 {strides = array<i32>} : memref<1x32x128xbf16, #tpu.memory_space<vmem>>, vector<1x32x128xbf16>,
    return
  }
  func.func @transform_0(%arg0: i32, %arg1: i32) -> (i32, i32, i32) {
    %c0_i32 = arith.constant 0 : i32
    %c0_i32_0 = arith.constant 0 : i32
    %c0_i32_1 = arith.constant 0 : i32
    return %arg0, %c0_i32, %c0_i32_0 : i32, i32, i32
  }
  func.func @transform_1(%arg0: i32, %arg1: i32) -> (i32, i32, i32) {
    %c0_i32 = arith.constant 0 : i32
    %c0_i32_0 = arith.constant 0 : i32
    %c0_i32_1 = arith.constant 0 : i32
    %c0_i32_2 = arith.constant 0 : i32
    return %c0_i32, %c0_i32_0, %c0_i32_1 : i32, i32, i32
  }
  func.func @transform_2(%arg0: i32, %arg1: i32) -> (i32, i32, i32) {
    %c0_i32 = arith.constant 0 : i32
    %c0_i32_0 = arith.constant 0 : i32
    return %arg0, %arg1, %c0_i32 : i32, i32, i32
  }
}

module attributes {stable_mosaic.version = 11 : i64} {
  func.func @_conv_s2d_kernel(%arg0: i32, %arg1: i32, %arg2: memref<1x32x128xbf16, #tpu.memory_space<vmem>>, %arg3: memref<4x128x128xbf16, #tpu.memory_space<vmem>>, %arg4: memref<1x16x128xf32, #tpu.memory_space<vmem>>) attributes {dimension_semantics = [#tpu.dimension_semantics<parallel>, #tpu.dimension_semantics<parallel>], iteration_bounds = array<i64: 2, 1>, scalar_prefetch = 0 : i64, scratch_operands = 0 : i64, tpu.core_type = #tpu.core_type<tc>, window_params = [{transform_indices = @transform_0, window_bounds = array<i64: 1, 32, 128>}, {pipeline_mode = #tpu.pipeline_mode<synchronous>, transform_indices = @transform_1, window_bounds = array<i64: 4, 128, 128>}, {transform_indices = @transform_2, window_bounds = array<i64: 1, 16, 128>}]} {
    %c16_i32 = arith.constant 16 : i32
    %0 = arith.muli %arg1, %c16_i32 : i32
    %1 = tpu.assume_multiple %0, 16 : i32
    %c0 = arith.constant 0 : index
    %2 = arith.index_cast %1 : i32 to index
    %c0_0 = arith.constant 0 : index
    %3 = vector.load %arg2[%c0, %2, %c0_0] : memref<1x32x128xbf16, #tpu.memory_space<vmem>>, vector<1x24x128xbf16>
    %4 = vector.shape_cast %3 : vector<1x24x128xbf16> to vector<24x128xbf16>
    %5 = arith.extf %4 : vector<24x128xbf16> to vector<24x128xf32>
    %6 = vector.extract_strided_slice %5 {offsets = [0, 0], sizes = [16, 128], strides = [1, 1]} : vector<24x128xf32> to vector<16x128xf32>
    %7 = arith.truncf %6 : vector<16x128xf32> to vector<16x128xbf16>
    %c0_1 = arith.constant 0 : index
    %c0_2 = arith.constant 0 : index
    %c0_3 = arith.constant 0 : index
    %8 = vector.load %arg3[%c0_1, %c0_2, %c0_3] : memref<4x128x128xbf16, #tpu.memory_space<vmem>>, vector<1x128x128xbf16>
    %9 = vector.shape_cast %8 : vector<1x128x128xbf16> to vector<128x128xbf16>
    %cst = arith.constant dense<0.000000e+00> : vector<16x128xf32>
    %10 = tpu.matmul %7, %9, %cst {dimension_numbers = #tpu.dot_dimension_numbers<[1], [0], [0], [1], [0, 0, 1, 1], [], []>} : vector<16x128xbf16>, vector<128x128xbf16>, vector<16x128xf32> -> vector<16x128xf32>
    %11 = vector.extract_strided_slice %5 {offsets = [1, 0], sizes = [16, 128], strides = [1, 1]} : vector<24x128xf32> to vector<16x128xf32>
    %12 = arith.truncf %11 : vector<16x128xf32> to vector<16x128xbf16>
    %c1 = arith.constant 1 : index
    %c0_4 = arith.constant 0 : index
    %c0_5 = arith.constant 0 : index
    %13 = vector.load %arg3[%c1, %c0_4, %c0_5] : memref<4x128x128xbf16, #tpu.memory_space<vmem>>, vector<1x128x128xbf16>
    %14 = vector.shape_cast %13 : vector<1x128x128xbf16> to vector<128x128xbf16>
    %cst_6 = arith.constant dense<0.000000e+00> : vector<16x128xf32>
    %15 = tpu.matmul %12, %14, %cst_6 {dimension_numbers = #tpu.dot_dimension_numbers<[1], [0], [0], [1], [0, 0, 1, 1], [], []>} : vector<16x128xbf16>, vector<128x128xbf16>, vector<16x128xf32> -> vector<16x128xf32>
    %16 = arith.addf %10, %15 : vector<16x128xf32>
    %17 = vector.extract_strided_slice %5 {offsets = [3, 0], sizes = [16, 128], strides = [1, 1]} : vector<24x128xf32> to vector<16x128xf32>
    %18 = arith.truncf %17 : vector<16x128xf32> to vector<16x128xbf16>
    %c2 = arith.constant 2 : index
    %c0_7 = arith.constant 0 : index
    %c0_8 = arith.constant 0 : index
    %19 = vector.load %arg3[%c2, %c0_7, %c0_8] : memref<4x128x128xbf16, #tpu.memory_space<vmem>>, vector<1x128x128xbf16>
    %20 = vector.shape_cast %19 : vector<1x128x128xbf16> to vector<128x128xbf16>
    %cst_9 = arith.constant dense<0.000000e+00> : vector<16x128xf32>
    %21 = tpu.matmul %18, %20, %cst_9 {dimension_numbers = #tpu.dot_dimension_numbers<[1], [0], [0], [1], [0, 0, 1, 1], [], []>} : vector<16x128xbf16>, vector<128x128xbf16>, vector<16x128xf32> -> vector<16x128xf32>
    %22 = arith.addf %16, %21 : vector<16x128xf32>
    %23 = vector.extract_strided_slice %5 {offsets = [4, 0], sizes = [16, 128], strides = [1, 1]} : vector<24x128xf32> to vector<16x128xf32>
    %24 = arith.truncf %23 : vector<16x128xf32> to vector<16x128xbf16>
    %c3 = arith.constant 3 : index
    %c0_10 = arith.constant 0 : index
    %c0_11 = arith.constant 0 : index
    %25 = vector.load %arg3[%c3, %c0_10, %c0_11] : memref<4x128x128xbf16, #tpu.memory_space<vmem>>, vector<1x128x128xbf16>
    %26 = vector.shape_cast %25 : vector<1x128x128xbf16> to vector<128x128xbf16>
    %cst_12 = arith.constant dense<0.000000e+00> : vector<16x128xf32>
    %27 = tpu.matmul %24, %26, %cst_12 {dimension_numbers = #tpu.dot_dimension_numbers<[1], [0], [0], [1], [0, 0, 1, 1], [], []>} : vector<16x128xbf16>, vector<128x128xbf16>, vector<16x128xf32> -> vector<16x128xf32>
    %28 = arith.addf %22, %27 : vector<16x128xf32>
    %c0_13 = arith.constant 0 : index
    %c0_14 = arith.constant 0 : index
    %c0_15 = arith.constant 0 : index
    %29 = vector.load %arg4[%c0_13, %c0_14, %c0_15] : memref<1x16x128xf32, #tpu.memory_space<vmem>>, vector<1x16x128xf32>
    %30 = vector.shape_cast %29 : vector<1x16x128xf32> to vector<16x128xf32>
    %31 = vector.shape_cast %28 : vector<16x128xf32> to vector<1x16x128xf32>
    tpu.vector_store %arg4[%c0_13, %c0_14, %c0_15], %31 {strides = array<i32>} : memref<1x16x128xf32, #tpu.memory_space<vmem>>, vector<1x16x128xf32>,
    return
  }
  func.func @transform_0(%arg0: i32, %arg1: i32) -> (i32, i32, i32) {
    %c0_i32 = arith.constant 0 : i32
    %c0_i32_0 = arith.constant 0 : i32
    %c0_i32_1 = arith.constant 0 : i32
    return %arg0, %c0_i32, %c0_i32_0 : i32, i32, i32
  }
  func.func @transform_1(%arg0: i32, %arg1: i32) -> (i32, i32, i32) {
    %c0_i32 = arith.constant 0 : i32
    %c0_i32_0 = arith.constant 0 : i32
    %c0_i32_1 = arith.constant 0 : i32
    %c0_i32_2 = arith.constant 0 : i32
    return %c0_i32, %c0_i32_0, %c0_i32_1 : i32, i32, i32
  }
  func.func @transform_2(%arg0: i32, %arg1: i32) -> (i32, i32, i32) {
    %c0_i32 = arith.constant 0 : i32
    %c0_i32_0 = arith.constant 0 : i32
    return %arg0, %arg1, %c0_i32 : i32, i32, i32
  }
}

</mosaic_0001>

<llo_original>
// kernel: discriminator_forward.3
$region0: #{discriminator_forward.3}
  #allocation0 [shape = 'u32[]', space=smem, size = 0x4, offset = 0x4, fixed_abs, tag = 'smem constant byte address 0x4 - core index']
  #allocation1 [shape = 'u32[144,128]{1,0:T(1,128)}', space=vmem, size = 0x12000, scoped, tag = 'internal scratch']
  %s0 = inlined_call_operand.vmem [shape: bf16[2,96,12], index: 0, kind: input, shape index: {}]
  %s1 = inlined_call_operand.vmem [shape: bf16[4,12,128], index: 1, kind: input, shape index: {}]
  %s2 = inlined_call_operand.vmem [shape: bf16[2,80,128], index: 2, kind: output, shape index: {}]
  %s3 = sld [smem:[#allocation0]]
  $region41: #{discriminator_forward.3} parent=0
    _
  %s5 = ssub.s32 1, %s3
  %s6 = scalar_select 0, %s5, %s3
  loop: start=0, step=1, limit=4
  $region2: #{discriminator_forward.3} parent=0 // loop_pre_header
    _
  $region3: #{discriminator_forward.3} parent=0 // loop_header
    %s8 = sphi 0, %s12
    %p9 = scmp.ge.s32.totalorder %s8, 4
    %s15 = sphi 0, %s27
    %s16 = sphi 0, %s23
    %s17 = sphi 0, %s15
    %s18 = sphi 0, %s16
    %s19 = sphi 0, %s17
    %s20 = sphi 0, %s18
    %s30 = sphi 0, %s32
    %s33 = sphi 0, %s30
    %s34 = sphi 0, %s33
    %s50 = sphi 0, %s34
    %s54 = sphi 0, %s54
    %s56 = sphi 0, %s54
    %s57 = sphi 0, %s56
    %s71 = sphi 0, %s57
    %s79 = sphi 0, %s81
    %s82 = sphi 0, %s79
    %s83 = sphi 0, %s82
    %s99 = sphi 0, %s83
  $region4: #{discriminator_forward.3} parent=0 // loop_header_branch
    %11 = sbr.rel (%p9) target = $region8
  $region5: #{discriminator_forward.3} parent=0 // loop_body
    %s13 = ssub.s32 %s8, 1
    %s14 = ssub.s32 %s8, 2
    %s21 = sadd.s32 1, %s16
    %p22 = scmp.ge.s32.totalorder %s21, 1
    %s23 = scalar_select %p22, 0, %s21
    %s24 = sadd.s32 1, %s15
    %s25 = scalar_select %p22, %s24, %s15
    %p26 = scmp.ge.s32.totalorder %s25, 2
    %s27 = scalar_select %p26, 0, %s25
    %s28 = ssub.s32 %s15, %s27
    %p29 = scmp.eq.s32.totalorder %s28, 0
    %s31 = sadd.s32 %s30, 1
    %s32 = scalar_select %p29, %s30, %s31
    %p35 = pneg %p29
    %p36 = scmp.eq.s32.totalorder %s8, 1
    %p37 = por %p35, %p36
    %p38 = scmp.ne.s32.totalorder %s30, %s33
    %p39 = scmp.eq.s32.totalorder %s8, 0
    %p40 = por %p38, %p39
    %p41 = scmp.ne.s32.totalorder %s30, %s33
    %p42 = scmp.eq.s32.totalorder %s13, 1
    %p43 = por %p41, %p42
    %p44 = scmp.ne.s32.totalorder %s33, %s34
    %p45 = scmp.eq.s32.totalorder %s13, 0
    %p46 = por %p44, %p45
    %p47 = scmp.ne.s32.totalorder %s33, %s34
    %p48 = scmp.eq.s32.totalorder %s14, 1
    %p49 = por %p47, %p48
    %p51 = scmp.ne.s32.totalorder %s34, %s50
    %p52 = scmp.eq.s32.totalorder %s14, 0
    %p53 = por %p51, %p52
    %s55 = sadd.s32 %s54, 1
    %p58 = scmp.eq.s32.totalorder %s8, 1
    %p59 = scmp.ne.s32.totalorder %s54, %s56
    %p60 = scmp.eq.s32.totalorder %s8, 0
    %p61 = por %p59, %p60
    %p62 = scmp.ne.s32.totalorder %s54, %s56
    %p63 = scmp.eq.s32.totalorder %s13, 1
    %p64 = por %p62, %p63
    %p65 = scmp.ne.s32.totalorder %s56, %s57
    %p66 = scmp.eq.s32.totalorder %s13, 0
    %p67 = por %p65, %p66
    %p68 = scmp.ne.s32.totalorder %s56, %s57
    %p69 = scmp.eq.s32.totalorder %s14, 1
    %p70 = por %p68, %p69
    %p72 = scmp.ne.s32.totalorder %s57, %s71
    %p73 = scmp.eq.s32.totalorder %s14, 0
    %p74 = por %p72, %p73
    %s75 = ssub.s32 %s15, %s27
    %s76 = ssub.s32 %s16, %s23
    %s77 = sor.u32 %s75, %s76
    %p78 = scmp.eq.s32.totalorder %s77, 0
    %s80 = sadd.s32 %s79, 1
    %s81 = scalar_select %p78, %s79, %s80
    %p84 = pneg %p78
    %p85 = scmp.eq.s32.totalorder %s8, 1
    %p86 = por %p84, %p85
    %p87 = scmp.ne.s32.totalorder %s79, %s82
    %p88 = scmp.eq.s32.totalorder %s8, 0
    %p89 = por %p87, %p88
    %p90 = scmp.ne.s32.totalorder %s79, %s82
    %p91 = scmp.eq.s32.totalorder %s13, 1
    %p92 = por %p90, %p91
    %p93 = scmp.ne.s32.totalorder %s82, %s83
    %p94 = scmp.eq.s32.totalorder %s13, 0
    %p95 = por %p93, %p94
    %p96 = scmp.ne.s32.totalorder %s82, %s83
    %p97 = scmp.eq.s32.totalorder %s14, 1
    %p98 = por %p96, %p97
    %p100 = scmp.ne.s32.totalorder %s83, %s99
    %p101 = scmp.eq.s32.totalorder %s14, 0
    %p102 = por %p100, %p101
    %p103 = scmp.le.s32.totalorder 1, %s8
    %p104 = scmp.lt.s32.totalorder %s8, 3
    %p105 = pnand %p103, %p104
    %p106 = pneg %p105
    // Predicated region
    $region9: #{discriminator_forward.3} parent=5 // pred_check
      _
    $region10: #{discriminator_forward.3} parent=5 // pred_check_branch
      %108 = sbr.rel (%p105) target = $region12
    $region11: #{discriminator_forward.3} parent=5 // pred_region
      %s109 = ssub.s32 %s8, 1
      // Predicated region
      $region13: #{discriminator_forward.3} parent=11 // pred_check
        %p110 = pneg %p67
      $region14: #{discriminator_forward.3} parent=11 // pred_check_branch
        %112 = sbr.rel (%p110) target = $region16
      $region15: #{discriminator_forward.3} parent=11 // pred_region
        _
      $region16: #{discriminator_forward.3} parent=11 // pred_fallthru
        _
    $region12: #{discriminator_forward.3} parent=5 // pred_fallthru
      _
    %p113 = scmp.lt.s32.totalorder %s8, 2
    // Predicated region
    $region17: #{discriminator_forward.3} parent=5 // pred_check
      %p114 = pneg %p113
    $region18: #{discriminator_forward.3} parent=5 // pred_check_branch
      %116 = sbr.rel (%p114) target = $region20
    $region19: #{discriminator_forward.3} parent=5 // pred_region
      // Predicated region
      $region21: #{discriminator_forward.3} parent=19 // pred_check
        %p117 = pneg %p40
      $region22: #{discriminator_forward.3} parent=19 // pred_check_branch
        %119 = sbr.rel (%p117) target = $region24
      $region23: #{discriminator_forward.3} parent=19 // pred_region
        %p120 = scmp.lt.s32.totalorder %s15, 1
        %s121 = scalar_select %p120, %s15, 1
        %s122 = smul.addr %s121, 12
        %s123 = smul.addr %s122, 4
        %s124 = scalar_lea.vmem %s0, %s123
      $region24: #{discriminator_forward.3} parent=19 // pred_fallthru
        _
    $region20: #{discriminator_forward.3} parent=5 // pred_fallthru
      _
    %p125 = scmp.le.s32.totalorder 1, %s8
    %p126 = scmp.lt.s32.totalorder %s8, 3
    %p127 = pnand %p125, %p126
    %p128 = pneg %p127
    // Predicated region
    $region25: #{discriminator_forward.3} parent=5 // pred_check
      _
    $region26: #{discriminator_forward.3} parent=5 // pred_check_branch
      %130 = sbr.rel (%p127) target = $region28
    $region27: #{discriminator_forward.3} parent=5 // pred_region
      %s131 = ssub.s32 %s8, 1
      %p132 = scmp.lt.s32.totalorder %s17, 1
      %s133 = scalar_select %p132, %s17, 1
      %s134 = smul.addr %s133, 12
      %s135 = smul.addr %s134, 4
      %s136 = scalar_lea.vmem %s0, %s135
      %p137 = pneg %p46
      %p138 = pneg %p43
      %p139 = pneg %p67
      %p140 = pneg %p64
      %p141 = pneg %p95
      %p142 = pneg %p92
      %s143 = smul.u32 10, %s18
      %p144 = scmp.lt.s32.totalorder %s17, 1
      %s145 = scalar_select %p144, %s17, 1
      %p146 = scmp.lt.s32.totalorder %s143, 9
      %s147 = scalar_select %p146, %s143, 9
      %s148 = smul.addr %s145, 10
      %s149 = sadd.s32 %s147, %s148
      %s150 = smul.addr %s149, 4
      %s151 = scalar_lea.vmem %s2, %s150
      %p152 = scmp.lt.s32.totalorder %s17, 1
      %s153 = scalar_select %p152, %s17, 1
      %s154 = smul.addr %s153, 12
      %s155 = smul.addr %s154, 4
      %s156 = scalar_lea.vmem %s0, %s155
      %s157 = smul.u32 10, %s18
      %p158 = scmp.lt.s32.totalorder %s17, 1
      %s159 = scalar_select %p158, %s17, 1
      %p160 = scmp.lt.s32.totalorder %s157, 9
      %s161 = scalar_select %p160, %s157, 9
      %s162 = smul.addr %s159, 10
      %s163 = sadd.s32 %s161, %s162
      %s164 = smul.addr %s163, 4
      %s165 = scalar_lea.vmem %s2, %s164
      %s166 = smul.u32 10, %s18
      %s168 = smul.u32 %s18, 80
      %s169 = sshra.s32 %s168, 3
      %s170 = sand.u32 %s168, 7
      %s171 = smul.addr %s169, 4
      %s172 = scalar_lea.vmem %s156, %s171
      %v173 = vld [vmem:[%s172] sm:$0xf]
      %v174 = vld [vmem:[%s172 + $0x4] sm:$0xf]
      %v175 = vld [vmem:[%s172 + $0x8] sm:$0xf]
      %v176 = vld [vmem:[%s172 + $0xc] sm:$0xf]
      %v177 = vld [vmem:[%s172 + $0x10] sm:$0xf]
      %v178 = vld [vmem:[%s172 + $0x14] sm:$0xf]
      %v179 = vld [vmem:[%s172 + $0x18] sm:$0xf]
      %v180 = vld [vmem:[%s172 + $0x1c] sm:$0xf]
      %v181 = vld [vmem:[%s172 + $0x20] sm:$0xf]
      %v182 = vld [vmem:[%s172 + $0x24] sm:$0xf]
      %v183 = vld [vmem:[%s172 + $0x28] sm:$0xf]
      %v184 = vld [vmem:[%s172 + $0x2c] sm:$0xf]
      %v185 = vunpack.c.l.bf16 %v173
      %v186 = vunpack.c.l.bf16 %v174
      %v187 = vunpack.c.l.bf16 %v175
      %v188 = vunpack.c.l.bf16 %v176
      %v189 = vunpack.c.l.bf16 %v177
      %v190 = vunpack.c.l.bf16 %v178
      %v191 = vunpack.c.l.bf16 %v179
      %v192 = vunpack.c.l.bf16 %v180
      %v193 = vunpack.c.l.bf16 %v181
      %v194 = vunpack.c.l.bf16 %v182
      %v195 = vunpack.c.l.bf16 %v183
      %v196 = vunpack.c.l.bf16 %v184
      %v197 = vpack.c.bf16 %v186, %v185
      %v198 = vpack.c.bf16 %v188, %v187
      %v199 = vpack.c.bf16 %v190, %v189
      %v200 = vpack.c.bf16 %v192, %v191
      %v201 = vpack.c.bf16 %v194, %v193
      %v202 = vld [vmem:[%s1] sm:$0xf]
      %v203 = vld [vmem:[%s1 + $0x4] sm:$0x3]
      %v204 = vpack.c.bf16 %v195, %v195
      %s205 = scalar_lea.vmem %s1, 8
      %v206 = vld [vmem:[%s205] sm:$0xf]
      %v207 = vld [vmem:[%s205 + $0x4] sm:$0x3]
      %vm208 = vsmask.f32 7424
      %v210 = vshrl.u32 %v197, 16
      %v212 = vshll.u32 %v197, 16
      %v214 = vrot.slane %v212, 1
      %v215 = vor.u32 %v210, %v214
      %v217 = vshll.u32 %v198, 16
      %v219 = vrot.slane %v217, 1
      %v220 = vsel %vm208, %v215, %v219
      %v221 = vshrl.u32 %v198, 16
      %v223 = vor.u32 %v221, %v219
      %v225 = vshll.u32 %v199, 16
      %v227 = vrot.slane %v225, 1
      %v228 = vsel %vm208, %v223, %v227
      %v229 = vshrl.u32 %v199, 16
      %v231 = vor.u32 %v229, %v227
      %v233 = vshll.u32 %v200, 16
      %v235 = vrot.slane %v233, 1
      %v236 = vsel %vm208, %v231, %v235
      %v237 = vshrl.u32 %v200, 16
      %v239 = vor.u32 %v237, %v235
      %v241 = vshll.u32 %v201, 16
      %v243 = vrot.slane %v241, 1
      %v244 = vsel %vm208, %v239, %v243
      %v245 = vshrl.u32 %v201, 16
      %v247 = vor.u32 %v245, %v243
      %v249 = vshll.u32 %v204, 16
      %v251 = vrot.slane %v249, 1
      %v252 = vsel %vm208, %v247, %v251
      %v255 = vunpack.c.l.b16 %v206
      %v256 = vunpack.c.l.b16 %v207
      %v257 = vpack.c.b16 %v256, %v255
      %vm258 = vcmask 97280
      %v260 = vsel %vm258, %v220, 0
      %v263 = vsel %vm258, %v228, 0
      %v266 = vsel %vm258, %v236, 0
      %v269 = vsel %vm258, %v244, 0
      %v272 = vsel %vm258, %v252, 0
      %vm274 = vcmask 1045504
      %v276 = vsel %vm274, %v257, 0
      %278 = vmatprep.subr.bf16.mxu0 0
      %279 = vmatpush1.bf16.msra.mxu0 0
      %280 = vmatprep.subr.bf16.mxu0 0
      %281 = vmatpush1.bf16.msra.mxu0 0
      %282 = vmatprep.subr.bf16.mxu0 0
      %283 = vmatpush1.bf16.msra.mxu0 0
      %284 = vmatprep.subr.bf16.mxu0 0
      %285 = vmatpush1.bf16.msra.mxu0 0
      %286 = vmatprep.subr.bf16.mxu0 0
      %287 = vmatpush1.bf16.msra.mxu0 0
      %288 = vmatprep.subr.bf16.mxu0 0
      %289 = vmatpush1.bf16.msra.mxu0 0
      %290 = vmatprep.subr.bf16.mxu0 0
      %291 = vmatpush1.bf16.msra.mxu0 0
      %292 = vmatprep.subr.bf16.mxu0 0
      %293 = vmatpush1.bf16.msra.mxu0 %v276
      %294 = vmatprep.subr.bf16.mxu0 0
      %295 = vmatpush2.bf16.msra.mxu0 0
      %296 = vmatprep.subr.bf16.mxu0 0
      %297 = vmatpush2.bf16.msra.mxu0 0
      %298 = vmatprep.subr.bf16.mxu0 0
      %299 = vmatpush2.bf16.msra.mxu0 0
      %300 = vmatprep.subr.bf16.mxu0 0
      %301 = vmatpush2.bf16.msra.mxu0 0
      %302 = vmatprep.subr.bf16.mxu0 0
      %303 = vmatpush2.bf16.msra.mxu0 0
      %304 = vmatprep.subr.bf16.mxu0 0
      %305 = vmatpush2.bf16.msra.mxu0 0
      %306 = vmatprep.subr.bf16.mxu0 0
      %307 = vmatpush2.bf16.msra.mxu0 0
      %308 = vmatprep.subr.bf16.mxu0 0
      %309 = vmatpush2.bf16.msra.mxu0 0
      %310 = vmatprep.mubr.bf16.mxu0 0
      %311 = vmatmul.mubr.bf16.gmra.mxu0 %v260
      %v312 = vpop.f32.mrf.mxu0
      %v313 = vadd.f32 0.0, %v312
      %v314 = vpop.f32.mrf.mxu0
      %v315 = vpop.f32.mrf.mxu0
      %v316 = vadd.f32 0.0, %v315
      %v317 = vpop.f32.mrf.mxu0
      %318 = vmatprep.mubr.bf16.mxu0 0
      %319 = vmatmul.mubr.bf16.gmra.mxu0 %v263
      %v320 = vpop.f32.mrf.mxu0
      %v321 = vadd.f32 0.0, %v320
      %v322 = vpop.f32.mrf.mxu0
      %v323 = vpop.f32.mrf.mxu0
      %v324 = vadd.f32 0.0, %v323
      %v325 = vpop.f32.mrf.mxu0
      %326 = vmatprep.mubr.bf16.mxu0 0
      %327 = vmatmul.mubr.bf16.gmra.mxu0 %v266
      %v328 = vpop.f32.mrf.mxu0
      %v329 = vadd.f32 0.0, %v328
      %v330 = vpop.f32.mrf.mxu0
      %v331 = vpop.f32.mrf.mxu0
      %v332 = vadd.f32 0.0, %v331
      %v333 = vpop.f32.mrf.mxu0
      %334 = vmatprep.mubr.bf16.mxu0 0
      %335 = vmatmul.mubr.bf16.gmra.mxu0 %v269
      %v336 = vpop.f32.mrf.mxu0
      %v337 = vadd.f32 0.0, %v336
      %v338 = vpop.f32.mrf.mxu0
      %v339 = vpop.f32.mrf.mxu0
      %v340 = vadd.f32 0.0, %v339
      %v341 = vpop.f32.mrf.mxu0
      %342 = vmatprep.mubr.bf16.mxu0 0
      %343 = vmatmul.mubr.bf16.gmra.mxu0 %v272
      %v344 = vpop.f32.mrf.mxu0
      %v345 = vadd.f32 0.0, %v344
      %v346 = vpop.f32.mrf.mxu0
      %v347 = vpop.f32.mrf.mxu0
      %v348 = vadd.f32 0.0, %v347
      %v349 = vpop.f32.mrf.mxu0
      %350 = vdwg.mxu0
      %v353 = vunpack.c.l.b16 %v202
      %v354 = vunpack.c.l.b16 %v203
      %v355 = vpack.c.b16 %v354, %v353
      %v356 = vsel %vm258, %v197, 0
      %v358 = vsel %vm258, %v198, 0
      %v360 = vsel %vm258, %v199, 0
      %v362 = vsel %vm258, %v200, 0
      %v364 = vsel %vm258, %v201, 0
      %v367 = vsel %vm274, %v355, 0
      %369 = vmatprep.subr.bf16.mxu0 0
      %370 = vmatpush1.bf16.msra.mxu0 0
      %371 = vmatprep.subr.bf16.mxu0 0
      %372 = vmatpush1.bf16.msra.mxu0 0
      %373 = vmatprep.subr.bf16.mxu0 0
      %374 = vmatpush1.bf16.msra.mxu0 0
      %375 = vmatprep.subr.bf16.mxu0 0
      %376 = vmatpush1.bf16.msra.mxu0 0
      %377 = vmatprep.subr.bf16.mxu0 0
      %378 = vmatpush1.bf16.msra.mxu0 0
      %379 = vmatprep.subr.bf16.mxu0 0
      %380 = vmatpush1.bf16.msra.mxu0 0
      %381 = vmatprep.subr.bf16.mxu0 0
      %382 = vmatpush1.bf16.msra.mxu0 0
      %383 = vmatprep.subr.bf16.mxu0 0
      %384 = vmatpush1.bf16.msra.mxu0 %v367
      %385 = vmatprep.subr.bf16.mxu0 0
      %386 = vmatpush2.bf16.msra.mxu0 0
      %387 = vmatprep.subr.bf16.mxu0 0
      %388 = vmatpush2.bf16.msra.mxu0 0
      %389 = vmatprep.subr.bf16.mxu0 0
      %390 = vmatpush2.bf16.msra.mxu0 0
      %391 = vmatprep.subr.bf16.mxu0 0
      %392 = vmatpush2.bf16.msra.mxu0 0
      %393 = vmatprep.subr.bf16.mxu0 0
      %394 = vmatpush2.bf16.msra.mxu0 0
      %395 = vmatprep.subr.bf16.mxu0 0
      %396 = vmatpush2.bf16.msra.mxu0 0
      %397 = vmatprep.subr.bf16.mxu0 0
      %398 = vmatpush2.bf16.msra.mxu0 0
      %399 = vmatprep.subr.bf16.mxu0 0
      %400 = vmatpush2.bf16.msra.mxu0 0
      %401 = vmatprep.mubr.bf16.mxu0 0
      %402 = vmatmul.mubr.bf16.gmra.mxu0 %v356
      %v403 = vpop.f32.mrf.mxu0
      %v404 = vadd.f32 %v313, %v403
      %v405 = vpop.f32.mrf.mxu0
      %v406 = vpop.f32.mrf.mxu0
      %v407 = vadd.f32 %v316, %v406
      %v408 = vpop.f32.mrf.mxu0
      %409 = vmatprep.mubr.bf16.mxu0 0
      %410 = vmatmul.mubr.bf16.gmra.mxu0 %v358
      %v411 = vpop.f32.mrf.mxu0
      %v412 = vadd.f32 %v321, %v411
      %v413 = vpop.f32.mrf.mxu0
      %v414 = vpop.f32.mrf.mxu0
      %v415 = vadd.f32 %v324, %v414
      %v416 = vpop.f32.mrf.mxu0
      %417 = vmatprep.mubr.bf16.mxu0 0
      %418 = vmatmul.mubr.bf16.gmra.mxu0 %v360
      %v419 = vpop.f32.mrf.mxu0
      %v420 = vadd.f32 %v329, %v419
      %v421 = vpop.f32.mrf.mxu0
      %v422 = vpop.f32.mrf.mxu0
      %v423 = vadd.f32 %v332, %v422
      %v424 = vpop.f32.mrf.mxu0
      %425 = vmatprep.mubr.bf16.mxu0 0
      %426 = vmatmul.mubr.bf16.gmra.mxu0 %v362
      %v427 = vpop.f32.mrf.mxu0
      %v428 = vadd.f32 %v337, %v427
      %v429 = vpop.f32.mrf.mxu0
      %v430 = vpop.f32.mrf.mxu0
      %v431 = vadd.f32 %v340, %v430
      %v432 = vpop.f32.mrf.mxu0
      %433 = vmatprep.mubr.bf16.mxu0 0
      %434 = vmatmul.mubr.bf16.gmra.mxu0 %v364
      %v435 = vpop.f32.mrf.mxu0
      %v436 = vadd.f32 %v345, %v435
      %v437 = vpop.f32.mrf.mxu0
      %v438 = vpop.f32.mrf.mxu0
      %v439 = vadd.f32 %v348, %v438
      %v440 = vpop.f32.mrf.mxu0
      %441 = vdwg.mxu0
      %v442 = vpack.c.bf16 %v187, %v186
      %v443 = vpack.c.bf16 %v189, %v188
      %v444 = vpack.c.bf16 %v191, %v190
      %v445 = vpack.c.bf16 %v193, %v192
      %v446 = vpack.c.bf16 %v195, %v194
      %v447 = vpack.c.bf16 %v196, %v196
      %s448 = scalar_lea.vmem %s1, 16
      %v449 = vld [vmem:[%s448] sm:$0xf]
      %v450 = vld [vmem:[%s448 + $0x4] sm:$0x3]
      %v452 = vshrl.u32 %v442, 16
      %v454 = vshll.u32 %v442, 16
      %v456 = vrot.slane %v454, 1
      %v457 = vor.u32 %v452, %v456
      %v459 = vshll.u32 %v443, 16
      %v461 = vrot.slane %v459, 1
      %v462 = vsel %vm208, %v457, %v461
      %v463 = vshrl.u32 %v443, 16
      %v465 = vor.u32 %v463, %v461
      %v467 = vshll.u32 %v444, 16
      %v469 = vrot.slane %v467, 1
      %v470 = vsel %vm208, %v465, %v469
      %v471 = vshrl.u32 %v444, 16
      %v473 = vor.u32 %v471, %v469
      %v475 = vshll.u32 %v445, 16
      %v477 = vrot.slane %v475, 1
      %v478 = vsel %vm208, %v473, %v477
      %v479 = vshrl.u32 %v445, 16
      %v481 = vor.u32 %v479, %v477
      %v483 = vshll.u32 %v446, 16
      %v485 = vrot.slane %v483, 1
      %v486 = vsel %vm208, %v481, %v485
      %v487 = vshrl.u32 %v446, 16
      %v489 = vor.u32 %v487, %v485
      %v491 = vshll.u32 %v447, 16
      %v493 = vrot.slane %v491, 1
      %v494 = vsel %vm208, %v489, %v493
      %v497 = vunpack.c.l.b16 %v449
      %v498 = vunpack.c.l.b16 %v450
      %v499 = vpack.c.b16 %v498, %v497
      %v501 = vsel %vm258, %v462, 0
      %v504 = vsel %vm258, %v470, 0
      %v507 = vsel %vm258, %v478, 0
      %v510 = vsel %vm258, %v486, 0
      %v513 = vsel %vm258, %v494, 0
      %v516 = vsel %vm274, %v499, 0
      %518 = vmatprep.subr.bf16.mxu0 0
      %519 = vmatpush1.bf16.msra.mxu0 0
      %520 = vmatprep.subr.bf16.mxu0 0
      %521 = vmatpush1.bf16.msra.mxu0 0
      %522 = vmatprep.subr.bf16.mxu0 0
      %523 = vmatpush1.bf16.msra.mxu0 0
      %524 = vmatprep.subr.bf16.mxu0 0
      %525 = vmatpush1.bf16.msra.mxu0 0
      %526 = vmatprep.subr.bf16.mxu0 0
      %527 = vmatpush1.bf16.msra.mxu0 0
      %528 = vmatprep.subr.bf16.mxu0 0
      %529 = vmatpush1.bf16.msra.mxu0 0
      %530 = vmatprep.subr.bf16.mxu0 0
      %531 = vmatpush1.bf16.msra.mxu0 0
      %532 = vmatprep.subr.bf16.mxu0 0
      %533 = vmatpush1.bf16.msra.mxu0 %v516
      %534 = vmatprep.subr.bf16.mxu0 0
      %535 = vmatpush2.bf16.msra.mxu0 0
      %536 = vmatprep.subr.bf16.mxu0 0
      %537 = vmatpush2.bf16.msra.mxu0 0
      %538 = vmatprep.subr.bf16.mxu0 0
      %539 = vmatpush2.bf16.msra.mxu0 0
      %540 = vmatprep.subr.bf16.mxu0 0
      %541 = vmatpush2.bf16.msra.mxu0 0
      %542 = vmatprep.subr.bf16.mxu0 0
      %543 = vmatpush2.bf16.msra.mxu0 0
      %544 = vmatprep.subr.bf16.mxu0 0
      %545 = vmatpush2.bf16.msra.mxu0 0
      %546 = vmatprep.subr.bf16.mxu0 0
      %547 = vmatpush2.bf16.msra.mxu0 0
      %548 = vmatprep.subr.bf16.mxu0 0
      %549 = vmatpush2.bf16.msra.mxu0 0
      %550 = vmatprep.mubr.bf16.mxu0 0
      %551 = vmatmul.mubr.bf16.gmra.mxu0 %v501
      %v552 = vpop.f32.mrf.mxu0
      %v553 = vadd.f32 0.0, %v552
      %v554 = vpop.f32.mrf.mxu0
      %v555 = vpop.f32.mrf.mxu0
      %v556 = vadd.f32 0.0, %v555
      %v557 = vpop.f32.mrf.mxu0
      %558 = vmatprep.mubr.bf16.mxu0 0
      %559 = vmatmul.mubr.bf16.gmra.mxu0 %v504
      %v560 = vpop.f32.mrf.mxu0
      %v561 = vadd.f32 0.0, %v560
      %v562 = vpop.f32.mrf.mxu0
      %v563 = vpop.f32.mrf.mxu0
      %v564 = vadd.f32 0.0, %v563
      %v565 = vpop.f32.mrf.mxu0
      %566 = vmatprep.mubr.bf16.mxu0 0
      %567 = vmatmul.mubr.bf16.gmra.mxu0 %v507
      %v568 = vpop.f32.mrf.mxu0
      %v569 = vadd.f32 0.0, %v568
      %v570 = vpop.f32.mrf.mxu0
      %v571 = vpop.f32.mrf.mxu0
      %v572 = vadd.f32 0.0, %v571
      %v573 = vpop.f32.mrf.mxu0
      %574 = vmatprep.mubr.bf16.mxu0 0
      %575 = vmatmul.mubr.bf16.gmra.mxu0 %v510
      %v576 = vpop.f32.mrf.mxu0
      %v577 = vadd.f32 0.0, %v576
      %v578 = vpop.f32.mrf.mxu0
      %v579 = vpop.f32.mrf.mxu0
      %v580 = vadd.f32 0.0, %v579
      %v581 = vpop.f32.mrf.mxu0
      %582 = vmatprep.mubr.bf16.mxu0 0
      %583 = vmatmul.mubr.bf16.gmra.mxu0 %v513
      %v584 = vpop.f32.mrf.mxu0
      %v585 = vadd.f32 0.0, %v584
      %v586 = vpop.f32.mrf.mxu0
      %v587 = vpop.f32.mrf.mxu0
      %v588 = vadd.f32 0.0, %v587
      %v589 = vpop.f32.mrf.mxu0
      %590 = vdwg.mxu0
      %v591 = vadd.f32 %v404, %v553
      %v592 = vadd.f32 %v407, %v556
      %v593 = vadd.f32 %v412, %v561
      %v594 = vadd.f32 %v415, %v564
      %v595 = vadd.f32 %v420, %v569
      %v596 = vadd.f32 %v423, %v572
      %v597 = vadd.f32 %v428, %v577
      %v598 = vadd.f32 %v431, %v580
      %v599 = vadd.f32 %v436, %v585
      %v600 = vadd.f32 %v439, %v588
      %s601 = scalar_lea.vmem %s1, 24
      %v602 = vld [vmem:[%s601] sm:$0xf]
      %v603 = vld [vmem:[%s601 + $0x4] sm:$0x3]
      %vm610 = vcmask 1046528
      %v611 = vrot.slane %v442, 1
      %v612 = vrot.slane %v443, 1
      %v613 = vsel %vm610, %v611, %v612
      %v614 = vrot.slane %v444, 1
      %v615 = vsel %vm610, %v612, %v614
      %v616 = vrot.slane %v445, 1
      %v617 = vsel %vm610, %v614, %v616
      %v618 = vrot.slane %v446, 1
      %v619 = vsel %vm610, %v616, %v618
      %v620 = vrot.slane %v447, 1
      %v621 = vsel %vm610, %v618, %v620
      %v624 = vunpack.c.l.b16 %v602
      %v625 = vunpack.c.l.b16 %v603
      %v626 = vpack.c.b16 %v625, %v624
      %v628 = vsel %vm258, %v613, 0
      %v631 = vsel %vm258, %v615, 0
      %v634 = vsel %vm258, %v617, 0
      %v637 = vsel %vm258, %v619, 0
      %v640 = vsel %vm258, %v621, 0
      %v643 = vsel %vm274, %v626, 0
      %645 = vmatprep.subr.bf16.mxu0 0
      %646 = vmatpush1.bf16.msra.mxu0 0
      %647 = vmatprep.subr.bf16.mxu0 0
      %648 = vmatpush1.bf16.msra.mxu0 0
      %649 = vmatprep.subr.bf16.mxu0 0
      %650 = vmatpush1.bf16.msra.mxu0 0
      %651 = vmatprep.subr.bf16.mxu0 0
      %652 = vmatpush1.bf16.msra.mxu0 0
      %653 = vmatprep.subr.bf16.mxu0 0
      %654 = vmatpush1.bf16.msra.mxu0 0
      %655 = vmatprep.subr.bf16.mxu0 0
      %656 = vmatpush1.bf16.msra.mxu0 0
      %657 = vmatprep.subr.bf16.mxu0 0
      %658 = vmatpush1.bf16.msra.mxu0 0
      %659 = vmatprep.subr.bf16.mxu0 0
      %660 = vmatpush1.bf16.msra.mxu0 %v643
      %661 = vmatprep.subr.bf16.mxu0 0
      %662 = vmatpush2.bf16.msra.mxu0 0
      %663 = vmatprep.subr.bf16.mxu0 0
      %664 = vmatpush2.bf16.msra.mxu0 0
      %665 = vmatprep.subr.bf16.mxu0 0
      %666 = vmatpush2.bf16.msra.mxu0 0
      %667 = vmatprep.subr.bf16.mxu0 0
      %668 = vmatpush2.bf16.msra.mxu0 0
      %669 = vmatprep.subr.bf16.mxu0 0
      %670 = vmatpush2.bf16.msra.mxu0 0
      %671 = vmatprep.subr.bf16.mxu0 0
      %672 = vmatpush2.bf16.msra.mxu0 0
      %673 = vmatprep.subr.bf16.mxu0 0
      %674 = vmatpush2.bf16.msra.mxu0 0
      %675 = vmatprep.subr.bf16.mxu0 0
      %676 = vmatpush2.bf16.msra.mxu0 0
      %677 = vmatprep.mubr.bf16.mxu0 0
      %678 = vmatmul.mubr.bf16.gmra.mxu0 %v628
      %v679 = vpop.f32.mrf.mxu0
      %v680 = vadd.f32 0.0, %v679
      %v681 = vpop.f32.mrf.mxu0
      %v682 = vpop.f32.mrf.mxu0
      %v683 = vadd.f32 0.0, %v682
      %v684 = vpop.f32.mrf.mxu0
      %685 = vmatprep.mubr.bf16.mxu0 0
      %686 = vmatmul.mubr.bf16.gmra.mxu0 %v631
      %v687 = vpop.f32.mrf.mxu0
      %v688 = vadd.f32 0.0, %v687
      %v689 = vpop.f32.mrf.mxu0
      %v690 = vpop.f32.mrf.mxu0
      %v691 = vadd.f32 0.0, %v690
      %v692 = vpop.f32.mrf.mxu0
      %693 = vmatprep.mubr.bf16.mxu0 0
      %694 = vmatmul.mubr.bf16.gmra.mxu0 %v634
      %v695 = vpop.f32.mrf.mxu0
      %v696 = vadd.f32 0.0, %v695
      %v697 = vpop.f32.mrf.mxu0
      %v698 = vpop.f32.mrf.mxu0
      %v699 = vadd.f32 0.0, %v698
      %v700 = vpop.f32.mrf.mxu0
      %701 = vmatprep.mubr.bf16.mxu0 0
      %702 = vmatmul.mubr.bf16.gmra.mxu0 %v637
      %v703 = vpop.f32.mrf.mxu0
      %v704 = vadd.f32 0.0, %v703
      %v705 = vpop.f32.mrf.mxu0
      %v706 = vpop.f32.mrf.mxu0
      %v707 = vadd.f32 0.0, %v706
      %v708 = vpop.f32.mrf.mxu0
      %709 = vmatprep.mubr.bf16.mxu0 0
      %710 = vmatmul.mubr.bf16.gmra.mxu0 %v640
      %v711 = vpop.f32.mrf.mxu0
      %v712 = vadd.f32 0.0, %v711
      %v713 = vpop.f32.mrf.mxu0
      %v714 = vpop.f32.mrf.mxu0
      %v715 = vadd.f32 0.0, %v714
      %v716 = vpop.f32.mrf.mxu0
      %717 = vdwg.mxu0
      %v718 = vadd.f32 %v591, %v680
      %v719 = vadd.f32 %v592, %v683
      %v720 = vadd.f32 %v593, %v688
      %v721 = vadd.f32 %v594, %v691
      %v722 = vadd.f32 %v595, %v696
      %v723 = vadd.f32 %v596, %v699
      %v724 = vadd.f32 %v597, %v704
      %v725 = vadd.f32 %v598, %v707
      %v726 = vadd.f32 %v599, %v712
      %v727 = vadd.f32 %v600, %v715
      %vm728 = vcmp.ge.f32.partialorder %v718, 0.0
      %vm729 = vcmp.ge.f32.partialorder %v719, 0.0
      %vm730 = vcmp.ge.f32.partialorder %v720, 0.0
      %vm731 = vcmp.ge.f32.partialorder %v721, 0.0
      %vm732 = vcmp.ge.f32.partialorder %v722, 0.0
      %vm733 = vcmp.ge.f32.partialorder %v723, 0.0
      %vm734 = vcmp.ge.f32.partialorder %v724, 0.0
      %vm735 = vcmp.ge.f32.partialorder %v725, 0.0
      %vm736 = vcmp.ge.f32.partialorder %v726, 0.0
      %vm737 = vcmp.ge.f32.partialorder %v727, 0.0
      %v738 = vmul.f32 %v718, 0.2
      %v739 = vmul.f32 %v719, 0.2
      %v740 = vmul.f32 %v720, 0.2
      %v741 = vmul.f32 %v721, 0.2
      %v742 = vmul.f32 %v722, 0.2
      %v743 = vmul.f32 %v723, 0.2
      %v744 = vmul.f32 %v724, 0.2
      %v745 = vmul.f32 %v725, 0.2
      %v746 = vmul.f32 %v726, 0.2
      %v747 = vmul.f32 %v727, 0.2
      %v748 = vsel %vm728, %v718, %v738
      %v749 = vsel %vm729, %v719, %v739
      %v750 = vsel %vm730, %v720, %v740
      %v751 = vsel %vm731, %v721, %v741
      %v752 = vsel %vm732, %v722, %v742
      %v753 = vsel %vm733, %v723, %v743
      %v754 = vsel %vm734, %v724, %v744
      %v755 = vsel %vm735, %v725, %v745
      %v756 = vsel %vm736, %v726, %v746
      %v757 = vsel %vm737, %v727, %v747
      %v758 = vpack.c.bf16 %v749, %v748
      %v759 = vpack.c.bf16 %v751, %v750
      %v760 = vpack.c.bf16 %v753, %v752
      %v761 = vpack.c.bf16 %v755, %v754
      %v762 = vpack.c.bf16 %v757, %v756
      %v768 = vunpack.c.l.b16 %v758
      %v769 = vunpack.c.h.b16 %v758
      %v770 = vunpack.c.l.b16 %v759
      %v771 = vunpack.c.h.b16 %v759
      %v772 = vunpack.c.l.b16 %v760
      %v773 = vunpack.c.h.b16 %v760
      %v774 = vunpack.c.l.b16 %v761
      %v775 = vunpack.c.h.b16 %v761
      %v776 = vunpack.c.l.b16 %v762
      %v777 = vunpack.c.h.b16 %v762
      %v778 = vpack.c.b16 %v768, %v768
      %v779 = vpack.c.b16 %v769, %v769
      %v780 = vpack.c.b16 %v770, %v770
      %v781 = vpack.c.b16 %v771, %v771
      %v782 = vpack.c.b16 %v772, %v772
      %v783 = vpack.c.b16 %v773, %v773
      %v784 = vpack.c.b16 %v774, %v774
      %v785 = vpack.c.b16 %v775, %v775
      %v786 = vpack.c.b16 %v776, %v776
      %v787 = vpack.c.b16 %v777, %v777
      %798 = vst [vmem:[%s165] sm:$0xf] %v778
      %799 = vst [vmem:[%s165 + $0x4] sm:$0xf] %v779
      %800 = vst [vmem:[%s165 + $0x8] sm:$0xf] %v780
      %801 = vst [vmem:[%s165 + $0xc] sm:$0xf] %v781
      %802 = vst [vmem:[%s165 + $0x10] sm:$0xf] %v782
      %803 = vst [vmem:[%s165 + $0x14] sm:$0xf] %v783
      %804 = vst [vmem:[%s165 + $0x18] sm:$0xf] %v784
      %805 = vst [vmem:[%s165 + $0x1c] sm:$0xf] %v785
      %806 = vst [vmem:[%s165 + $0x20] sm:$0xf] %v786
      %807 = vst [vmem:[%s165 + $0x24] sm:$0xf] %v787
      %s808 = smul.u32 10, %s18
      %p809 = scmp.lt.s32.totalorder %s17, 1
      %s810 = scalar_select %p809, %s17, 1
      %p811 = scmp.lt.s32.totalorder %s808, 9
      %s812 = scalar_select %p811, %s808, 9
      %s813 = smul.addr %s810, 10
      %s814 = sadd.s32 %s812, %s813
      %s815 = smul.addr %s814, 4
      %s816 = scalar_lea.vmem %s2, %s815
      // Predicated region
      $region29: #{discriminator_forward.3} parent=27 // pred_check
        %p817 = pneg %p92
      $region30: #{discriminator_forward.3} parent=27 // pred_check_branch
        %819 = sbr.rel (%p817) target = $region32
      $region31: #{discriminator_forward.3} parent=27 // pred_region
        %s820 = smul.u32 10, %s18
      $region32: #{discriminator_forward.3} parent=27 // pred_fallthru
        _
    $region28: #{discriminator_forward.3} parent=5 // pred_fallthru
      _
    %p821 = scmp.le.s32.totalorder 2, %s8
    // Predicated region
    $region33: #{discriminator_forward.3} parent=5 // pred_check
      %p822 = pneg %p821
    $region34: #{discriminator_forward.3} parent=5 // pred_check_branch
      %824 = sbr.rel (%p822) target = $region36
    $region35: #{discriminator_forward.3} parent=5 // pred_region
      %s825 = ssub.s32 %s8, 2
      // Predicated region
      $region37: #{discriminator_forward.3} parent=35 // pred_check
        %p826 = pneg %p98
      $region38: #{discriminator_forward.3} parent=35 // pred_check_branch
        %828 = sbr.rel (%p826) target = $region40
      $region39: #{discriminator_forward.3} parent=35 // pred_region
        %s829 = smul.u32 10, %s20
        %p830 = scmp.lt.s32.totalorder %s19, 1
        %s831 = scalar_select %p830, %s19, 1
        %p832 = scmp.lt.s32.totalorder %s829, 9
        %s833 = scalar_select %p832, %s829, 9
        %s834 = smul.addr %s831, 10
        %s835 = sadd.s32 %s833, %s834
        %s836 = smul.addr %s835, 4
        %s837 = scalar_lea.vmem %s2, %s836
      $region40: #{discriminator_forward.3} parent=35 // pred_fallthru
        _
    $region36: #{discriminator_forward.3} parent=5 // pred_fallthru
      _
  $region6: #{discriminator_forward.3} parent=0 // loop_footer
    %s12 = sadd.s32 1, %s8
  $region7: #{discriminator_forward.3} parent=0 // loop_footer_branch
    %7 = sbr.rel target = $region3
  $region8: #{discriminator_forward.3} parent=0 // loop_exit
    _

// kernel: discriminator_forward.4
$region0: #{discriminator_forward.4}
  #allocation0 [shape = 'u32[]', space=smem, size = 0x4, offset = 0x4, fixed_abs, tag = 'smem constant byte address 0x4 - core index']
  #allocation1 [shape = 'u32[144,128]{1,0:T(1,128)}', space=vmem, size = 0x12000, scoped, tag = 'internal scratch']
  %s0 = inlined_call_operand.vmem [shape: bf16[2,48,64], index: 0, kind: input, shape index: {}]
  %s1 = inlined_call_operand.vmem [shape: bf16[4,64,128], index: 1, kind: input, shape index: {}]
  %s2 = inlined_call_operand.vmem [shape: bf16[2,32,128], index: 2, kind: output, shape index: {}]
  %s3 = sld [smem:[#allocation0]]
  $region41: #{discriminator_forward.4} parent=0
    _
  %s5 = ssub.s32 1, %s3
  %s6 = scalar_select 0, %s5, %s3
  loop: start=0, step=1, limit=4
  $region2: #{discriminator_forward.4} parent=0 // loop_pre_header
    _
  $region3: #{discriminator_forward.4} parent=0 // loop_header
    %s8 = sphi 0, %s12
    %p9 = scmp.ge.s32.totalorder %s8, 4
    %s15 = sphi 0, %s27
    %s16 = sphi 0, %s23
    %s17 = sphi 0, %s15
    %s18 = sphi 0, %s16
    %s19 = sphi 0, %s17
    %s20 = sphi 0, %s18
    %s30 = sphi 0, %s32
    %s33 = sphi 0, %s30
    %s34 = sphi 0, %s33
    %s50 = sphi 0, %s34
    %s54 = sphi 0, %s54
    %s56 = sphi 0, %s54
    %s57 = sphi 0, %s56
    %s71 = sphi 0, %s57
    %s79 = sphi 0, %s81
    %s82 = sphi 0, %s79
    %s83 = sphi 0, %s82
    %s99 = sphi 0, %s83
  $region4: #{discriminator_forward.4} parent=0 // loop_header_branch
    %11 = sbr.rel (%p9) target = $region8
  $region5: #{discriminator_forward.4} parent=0 // loop_body
    %s13 = ssub.s32 %s8, 1
    %s14 = ssub.s32 %s8, 2
    %s21 = sadd.s32 1, %s16
    %p22 = scmp.ge.s32.totalorder %s21, 1
    %s23 = scalar_select %p22, 0, %s21
    %s24 = sadd.s32 1, %s15
    %s25 = scalar_select %p22, %s24, %s15
    %p26 = scmp.ge.s32.totalorder %s25, 2
    %s27 = scalar_select %p26, 0, %s25
    %s28 = ssub.s32 %s15, %s27
    %p29 = scmp.eq.s32.totalorder %s28, 0
    %s31 = sadd.s32 %s30, 1
    %s32 = scalar_select %p29, %s30, %s31
    %p35 = pneg %p29
    %p36 = scmp.eq.s32.totalorder %s8, 1
    %p37 = por %p35, %p36
    %p38 = scmp.ne.s32.totalorder %s30, %s33
    %p39 = scmp.eq.s32.totalorder %s8, 0
    %p40 = por %p38, %p39
    %p41 = scmp.ne.s32.totalorder %s30, %s33
    %p42 = scmp.eq.s32.totalorder %s13, 1
    %p43 = por %p41, %p42
    %p44 = scmp.ne.s32.totalorder %s33, %s34
    %p45 = scmp.eq.s32.totalorder %s13, 0
    %p46 = por %p44, %p45
    %p47 = scmp.ne.s32.totalorder %s33, %s34
    %p48 = scmp.eq.s32.totalorder %s14, 1
    %p49 = por %p47, %p48
    %p51 = scmp.ne.s32.totalorder %s34, %s50
    %p52 = scmp.eq.s32.totalorder %s14, 0
    %p53 = por %p51, %p52
    %s55 = sadd.s32 %s54, 1
    %p58 = scmp.eq.s32.totalorder %s8, 1
    %p59 = scmp.ne.s32.totalorder %s54, %s56
    %p60 = scmp.eq.s32.totalorder %s8, 0
    %p61 = por %p59, %p60
    %p62 = scmp.ne.s32.totalorder %s54, %s56
    %p63 = scmp.eq.s32.totalorder %s13, 1
    %p64 = por %p62, %p63
    %p65 = scmp.ne.s32.totalorder %s56, %s57
    %p66 = scmp.eq.s32.totalorder %s13, 0
    %p67 = por %p65, %p66
    %p68 = scmp.ne.s32.totalorder %s56, %s57
    %p69 = scmp.eq.s32.totalorder %s14, 1
    %p70 = por %p68, %p69
    %p72 = scmp.ne.s32.totalorder %s57, %s71
    %p73 = scmp.eq.s32.totalorder %s14, 0
    %p74 = por %p72, %p73
    %s75 = ssub.s32 %s15, %s27
    %s76 = ssub.s32 %s16, %s23
    %s77 = sor.u32 %s75, %s76
    %p78 = scmp.eq.s32.totalorder %s77, 0
    %s80 = sadd.s32 %s79, 1
    %s81 = scalar_select %p78, %s79, %s80
    %p84 = pneg %p78
    %p85 = scmp.eq.s32.totalorder %s8, 1
    %p86 = por %p84, %p85
    %p87 = scmp.ne.s32.totalorder %s79, %s82
    %p88 = scmp.eq.s32.totalorder %s8, 0
    %p89 = por %p87, %p88
    %p90 = scmp.ne.s32.totalorder %s79, %s82
    %p91 = scmp.eq.s32.totalorder %s13, 1
    %p92 = por %p90, %p91
    %p93 = scmp.ne.s32.totalorder %s82, %s83
    %p94 = scmp.eq.s32.totalorder %s13, 0
    %p95 = por %p93, %p94
    %p96 = scmp.ne.s32.totalorder %s82, %s83
    %p97 = scmp.eq.s32.totalorder %s14, 1
    %p98 = por %p96, %p97
    %p100 = scmp.ne.s32.totalorder %s83, %s99
    %p101 = scmp.eq.s32.totalorder %s14, 0
    %p102 = por %p100, %p101
    %p103 = scmp.le.s32.totalorder 1, %s8
    %p104 = scmp.lt.s32.totalorder %s8, 3
    %p105 = pnand %p103, %p104
    %p106 = pneg %p105
    // Predicated region
    $region9: #{discriminator_forward.4} parent=5 // pred_check
      _
    $region10: #{discriminator_forward.4} parent=5 // pred_check_branch
      %108 = sbr.rel (%p105) target = $region12
    $region11: #{discriminator_forward.4} parent=5 // pred_region
      %s109 = ssub.s32 %s8, 1
      // Predicated region
      $region13: #{discriminator_forward.4} parent=11 // pred_check
        %p110 = pneg %p67
      $region14: #{discriminator_forward.4} parent=11 // pred_check_branch
        %112 = sbr.rel (%p110) target = $region16
      $region15: #{discriminator_forward.4} parent=11 // pred_region
        _
      $region16: #{discriminator_forward.4} parent=11 // pred_fallthru
        _
    $region12: #{discriminator_forward.4} parent=5 // pred_fallthru
      _
    %p113 = scmp.lt.s32.totalorder %s8, 2
    // Predicated region
    $region17: #{discriminator_forward.4} parent=5 // pred_check
      %p114 = pneg %p113
    $region18: #{discriminator_forward.4} parent=5 // pred_check_branch
      %116 = sbr.rel (%p114) target = $region20
    $region19: #{discriminator_forward.4} parent=5 // pred_region
      // Predicated region
      $region21: #{discriminator_forward.4} parent=19 // pred_check
        %p117 = pneg %p40
      $region22: #{discriminator_forward.4} parent=19 // pred_check_branch
        %119 = sbr.rel (%p117) target = $region24
      $region23: #{discriminator_forward.4} parent=19 // pred_region
        %p120 = scmp.lt.s32.totalorder %s15, 1
        %s121 = scalar_select %p120, %s15, 1
        %s122 = smul.addr %s121, 6
        %s123 = smul.addr %s122, 4
        %s124 = scalar_lea.vmem %s0, %s123
      $region24: #{discriminator_forward.4} parent=19 // pred_fallthru
        _
    $region20: #{discriminator_forward.4} parent=5 // pred_fallthru
      _
    %p125 = scmp.le.s32.totalorder 1, %s8
    %p126 = scmp.lt.s32.totalorder %s8, 3
    %p127 = pnand %p125, %p126
    %p128 = pneg %p127
    // Predicated region
    $region25: #{discriminator_forward.4} parent=5 // pred_check
      _
    $region26: #{discriminator_forward.4} parent=5 // pred_check_branch
      %130 = sbr.rel (%p127) target = $region28
    $region27: #{discriminator_forward.4} parent=5 // pred_region
      %s131 = ssub.s32 %s8, 1
      %p132 = scmp.lt.s32.totalorder %s17, 1
      %s133 = scalar_select %p132, %s17, 1
      %s134 = smul.addr %s133, 6
      %s135 = smul.addr %s134, 4
      %s136 = scalar_lea.vmem %s0, %s135
      %p137 = pneg %p46
      %p138 = pneg %p43
      %p139 = pneg %p67
      %p140 = pneg %p64
      %p141 = pneg %p95
      %p142 = pneg %p92
      %s143 = smul.u32 4, %s18
      %p144 = scmp.lt.s32.totalorder %s17, 1
      %s145 = scalar_select %p144, %s17, 1
      %p146 = scmp.lt.s32.totalorder %s143, 3
      %s147 = scalar_select %p146, %s143, 3
      %s148 = smul.addr %s145, 4
      %s149 = sadd.s32 %s147, %s148
      %s150 = smul.addr %s149, 4
      %s151 = scalar_lea.vmem %s2, %s150
      %p152 = scmp.lt.s32.totalorder %s17, 1
      %s153 = scalar_select %p152, %s17, 1
      %s154 = smul.addr %s153, 6
      %s155 = smul.addr %s154, 4
      %s156 = scalar_lea.vmem %s0, %s155
      %s157 = smul.u32 4, %s18
      %p158 = scmp.lt.s32.totalorder %s17, 1
      %s159 = scalar_select %p158, %s17, 1
      %p160 = scmp.lt.s32.totalorder %s157, 3
      %s161 = scalar_select %p160, %s157, 3
      %s162 = smul.addr %s159, 4
      %s163 = sadd.s32 %s161, %s162
      %s164 = smul.addr %s163, 4
      %s165 = scalar_lea.vmem %s2, %s164
      %s166 = smul.u32 4, %s18
      %s168 = smul.u32 %s18, 32
      %s169 = sshra.s32 %s168, 3
      %s170 = sand.u32 %s168, 7
      %s171 = smul.addr %s169, 4
      %s172 = scalar_lea.vmem %s156, %s171
      %v173 = vld [vmem:[%s172] sm:$0xf]
      %v174 = vld [vmem:[%s172 + $0x4] sm:$0xf]
      %v175 = vld [vmem:[%s172 + $0x8] sm:$0xf]
      %v176 = vld [vmem:[%s172 + $0xc] sm:$0xf]
      %v177 = vld [vmem:[%s172 + $0x10] sm:$0xf]
      %v178 = vunpack.c.l.bf16 %v173
      %v179 = vunpack.c.l.bf16 %v174
      %v180 = vunpack.c.l.bf16 %v175
      %v181 = vunpack.c.l.bf16 %v176
      %v182 = vunpack.c.l.bf16 %v177
      %v183 = vpack.c.bf16 %v179, %v178
      %v184 = vpack.c.bf16 %v181, %v180
      %v185 = vld [vmem:[%s1] sm:$0xf]
      %v186 = vld [vmem:[%s1 + $0x4] sm:$0xf]
      %v187 = vld [vmem:[%s1 + $0x8] sm:$0xf]
      %v188 = vld [vmem:[%s1 + $0xc] sm:$0xf]
      %v189 = vld [vmem:[%s1 + $0x10] sm:$0xf]
      %v190 = vld [vmem:[%s1 + $0x14] sm:$0xf]
      %v191 = vld [vmem:[%s1 + $0x18] sm:$0xf]
      %v192 = vld [vmem:[%s1 + $0x1c] sm:$0xf]
      %v193 = vpack.c.bf16 %v182, %v182
      %s194 = scalar_lea.vmem %s1, 32
      %v195 = vld [vmem:[%s194] sm:$0xf]
      %v196 = vld [vmem:[%s194 + $0x4] sm:$0xf]
      %v197 = vld [vmem:[%s194 + $0x8] sm:$0xf]
      %v198 = vld [vmem:[%s194 + $0xc] sm:$0xf]
      %v199 = vld [vmem:[%s194 + $0x10] sm:$0xf]
      %v200 = vld [vmem:[%s194 + $0x14] sm:$0xf]
      %v201 = vld [vmem:[%s194 + $0x18] sm:$0xf]
      %v202 = vld [vmem:[%s194 + $0x1c] sm:$0xf]
      %vm203 = vsmask.f32 7424
      %v205 = vshrl.u32 %v183, 16
      %v207 = vshll.u32 %v183, 16
      %v209 = vrot.slane %v207, 1
      %v210 = vor.u32 %v205, %v209
      %v212 = vshll.u32 %v184, 16
      %v214 = vrot.slane %v212, 1
      %v215 = vsel %vm203, %v210, %v214
      %v216 = vshrl.u32 %v184, 16
      %v218 = vor.u32 %v216, %v214
      %v220 = vshll.u32 %v193, 16
      %v222 = vrot.slane %v220, 1
      %v223 = vsel %vm203, %v218, %v222
      %v232 = vunpack.c.l.b16 %v195
      %v233 = vunpack.c.l.b16 %v196
      %v234 = vunpack.c.l.b16 %v197
      %v235 = vunpack.c.l.b16 %v198
      %v236 = vunpack.c.l.b16 %v199
      %v237 = vunpack.c.l.b16 %v200
      %v238 = vunpack.c.l.b16 %v201
      %v239 = vunpack.c.l.b16 %v202
      %v240 = vpack.c.b16 %v233, %v232
      %v241 = vpack.c.b16 %v235, %v234
      %v242 = vpack.c.b16 %v237, %v236
      %v243 = vpack.c.b16 %v239, %v238
      %vm248 = vcmask 523264
      %v250 = vsel %vm248, %v215, 0
      %v253 = vsel %vm248, %v223, 0
      %255 = vmatprep.subr.bf16.mxu0 0
      %256 = vmatpush1.bf16.msra.mxu0 0
      %257 = vmatprep.subr.bf16.mxu0 0
      %258 = vmatpush1.bf16.msra.mxu0 0
      %259 = vmatprep.subr.bf16.mxu0 0
      %260 = vmatpush1.bf16.msra.mxu0 0
      %261 = vmatprep.subr.bf16.mxu0 0
      %262 = vmatpush1.bf16.msra.mxu0 0
      %263 = vmatprep.subr.bf16.mxu0 0
      %264 = vmatpush1.bf16.msra.mxu0 %v243
      %265 = vmatprep.subr.bf16.mxu0 0
      %266 = vmatpush1.bf16.msra.mxu0 %v242
      %267 = vmatprep.subr.bf16.mxu0 0
      %268 = vmatpush1.bf16.msra.mxu0 %v241
      %269 = vmatprep.subr.bf16.mxu0 0
      %270 = vmatpush1.bf16.msra.mxu0 %v240
      %271 = vmatprep.subr.bf16.mxu0 0
      %272 = vmatpush2.bf16.msra.mxu0 0
      %273 = vmatprep.subr.bf16.mxu0 0
      %274 = vmatpush2.bf16.msra.mxu0 0
      %275 = vmatprep.subr.bf16.mxu0 0
      %276 = vmatpush2.bf16.msra.mxu0 0
      %277 = vmatprep.subr.bf16.mxu0 0
      %278 = vmatpush2.bf16.msra.mxu0 0
      %279 = vmatprep.subr.bf16.mxu0 0
      %280 = vmatpush2.bf16.msra.mxu0 0
      %281 = vmatprep.subr.bf16.mxu0 0
      %282 = vmatpush2.bf16.msra.mxu0 0
      %283 = vmatprep.subr.bf16.mxu0 0
      %284 = vmatpush2.bf16.msra.mxu0 0
      %285 = vmatprep.subr.bf16.mxu0 0
      %286 = vmatpush2.bf16.msra.mxu0 0
      %287 = vmatprep.mubr.bf16.mxu0 0
      %288 = vmatmul.mubr.bf16.gmra.mxu0 %v250
      %v289 = vpop.f32.mrf.mxu0
      %v290 = vadd.f32 0.0, %v289
      %v291 = vpop.f32.mrf.mxu0
      %v292 = vpop.f32.mrf.mxu0
      %v293 = vadd.f32 0.0, %v292
      %v294 = vpop.f32.mrf.mxu0
      %295 = vmatprep.mubr.bf16.mxu0 0
      %296 = vmatmul.mubr.bf16.gmra.mxu0 %v253
      %v297 = vpop.f32.mrf.mxu0
      %v298 = vadd.f32 0.0, %v297
      %v299 = vpop.f32.mrf.mxu0
      %v300 = vpop.f32.mrf.mxu0
      %v301 = vadd.f32 0.0, %v300
      %v302 = vpop.f32.mrf.mxu0
      %303 = vdwg.mxu0
      %v312 = vunpack.c.l.b16 %v185
      %v313 = vunpack.c.l.b16 %v186
      %v314 = vunpack.c.l.b16 %v187
      %v315 = vunpack.c.l.b16 %v188
      %v316 = vunpack.c.l.b16 %v189
      %v317 = vunpack.c.l.b16 %v190
      %v318 = vunpack.c.l.b16 %v191
      %v319 = vunpack.c.l.b16 %v192
      %v320 = vpack.c.b16 %v313, %v312
      %v321 = vpack.c.b16 %v315, %v314
      %v322 = vpack.c.b16 %v317, %v316
      %v323 = vpack.c.b16 %v319, %v318
      %v328 = vsel %vm248, %v183, 0
      %v330 = vsel %vm248, %v184, 0
      %332 = vmatprep.subr.bf16.mxu0 0
      %333 = vmatpush1.bf16.msra.mxu0 0
      %334 = vmatprep.subr.bf16.mxu0 0
      %335 = vmatpush1.bf16.msra.mxu0 0
      %336 = vmatprep.subr.bf16.mxu0 0
      %337 = vmatpush1.bf16.msra.mxu0 0
      %338 = vmatprep.subr.bf16.mxu0 0
      %339 = vmatpush1.bf16.msra.mxu0 0
      %340 = vmatprep.subr.bf16.mxu0 0
      %341 = vmatpush1.bf16.msra.mxu0 %v323
      %342 = vmatprep.subr.bf16.mxu0 0
      %343 = vmatpush1.bf16.msra.mxu0 %v322
      %344 = vmatprep.subr.bf16.mxu0 0
      %345 = vmatpush1.bf16.msra.mxu0 %v321
      %346 = vmatprep.subr.bf16.mxu0 0
      %347 = vmatpush1.bf16.msra.mxu0 %v320
      %348 = vmatprep.subr.bf16.mxu0 0
      %349 = vmatpush2.bf16.msra.mxu0 0
      %350 = vmatprep.subr.bf16.mxu0 0
      %351 = vmatpush2.bf16.msra.mxu0 0
      %352 = vmatprep.subr.bf16.mxu0 0
      %353 = vmatpush2.bf16.msra.mxu0 0
      %354 = vmatprep.subr.bf16.mxu0 0
      %355 = vmatpush2.bf16.msra.mxu0 0
      %356 = vmatprep.subr.bf16.mxu0 0
      %357 = vmatpush2.bf16.msra.mxu0 0
      %358 = vmatprep.subr.bf16.mxu0 0
      %359 = vmatpush2.bf16.msra.mxu0 0
      %360 = vmatprep.subr.bf16.mxu0 0
      %361 = vmatpush2.bf16.msra.mxu0 0
      %362 = vmatprep.subr.bf16.mxu0 0
      %363 = vmatpush2.bf16.msra.mxu0 0
      %364 = vmatprep.mubr.bf16.mxu0 0
      %365 = vmatmul.mubr.bf16.gmra.mxu0 %v328
      %v366 = vpop.f32.mrf.mxu0
      %v367 = vadd.f32 %v290, %v366
      %v368 = vpop.f32.mrf.mxu0
      %v369 = vpop.f32.mrf.mxu0
      %v370 = vadd.f32 %v293, %v369
      %v371 = vpop.f32.mrf.mxu0
      %372 = vmatprep.mubr.bf16.mxu0 0
      %373 = vmatmul.mubr.bf16.gmra.mxu0 %v330
      %v374 = vpop.f32.mrf.mxu0
      %v375 = vadd.f32 %v298, %v374
      %v376 = vpop.f32.mrf.mxu0
      %v377 = vpop.f32.mrf.mxu0
      %v378 = vadd.f32 %v301, %v377
      %v379 = vpop.f32.mrf.mxu0
      %380 = vdwg.mxu0
      %s381 = scalar_lea.vmem %s1, 64
      %v382 = vld [vmem:[%s381] sm:$0xf]
      %v383 = vld [vmem:[%s381 + $0x4] sm:$0xf]
      %v384 = vld [vmem:[%s381 + $0x8] sm:$0xf]
      %v385 = vld [vmem:[%s381 + $0xc] sm:$0xf]
      %v386 = vld [vmem:[%s381 + $0x10] sm:$0xf]
      %v387 = vld [vmem:[%s381 + $0x14] sm:$0xf]
      %v388 = vld [vmem:[%s381 + $0x18] sm:$0xf]
      %v389 = vld [vmem:[%s381 + $0x1c] sm:$0xf]
      %vm390 = vsmask.f32 5376
      %v391 = vrot.slane %v205, 2
      %v392 = vrot.slane %v207, 3
      %v393 = vor.u32 %v391, %v392
      %v394 = vrot.slane %v216, 2
      %v395 = vrot.slane %v212, 3
      %v396 = vor.u32 %v394, %v395
      %v397 = vsel %vm390, %v393, %v396
      %v398 = vshrl.u32 %v193, 16
      %v400 = vrot.slane %v398, 2
      %v401 = vrot.slane %v220, 3
      %v402 = vor.u32 %v400, %v401
      %v403 = vsel %vm390, %v396, %v402
      %v412 = vunpack.c.l.b16 %v382
      %v413 = vunpack.c.l.b16 %v383
      %v414 = vunpack.c.l.b16 %v384
      %v415 = vunpack.c.l.b16 %v385
      %v416 = vunpack.c.l.b16 %v386
      %v417 = vunpack.c.l.b16 %v387
      %v418 = vunpack.c.l.b16 %v388
      %v419 = vunpack.c.l.b16 %v389
      %v420 = vpack.c.b16 %v413, %v412
      %v421 = vpack.c.b16 %v415, %v414
      %v422 = vpack.c.b16 %v417, %v416
      %v423 = vpack.c.b16 %v419, %v418
      %v429 = vsel %vm248, %v397, 0
      %v432 = vsel %vm248, %v403, 0
      %434 = vmatprep.subr.bf16.mxu0 0
      %435 = vmatpush1.bf16.msra.mxu0 0
      %436 = vmatprep.subr.bf16.mxu0 0
      %437 = vmatpush1.bf16.msra.mxu0 0
      %438 = vmatprep.subr.bf16.mxu0 0
      %439 = vmatpush1.bf16.msra.mxu0 0
      %440 = vmatprep.subr.bf16.mxu0 0
      %441 = vmatpush1.bf16.msra.mxu0 0
      %442 = vmatprep.subr.bf16.mxu0 0
      %443 = vmatpush1.bf16.msra.mxu0 %v423
      %444 = vmatprep.subr.bf16.mxu0 0
      %445 = vmatpush1.bf16.msra.mxu0 %v422
      %446 = vmatprep.subr.bf16.mxu0 0
      %447 = vmatpush1.bf16.msra.mxu0 %v421
      %448 = vmatprep.subr.bf16.mxu0 0
      %449 = vmatpush1.bf16.msra.mxu0 %v420
      %450 = vmatprep.subr.bf16.mxu0 0
      %451 = vmatpush2.bf16.msra.mxu0 0
      %452 = vmatprep.subr.bf16.mxu0 0
      %453 = vmatpush2.bf16.msra.mxu0 0
      %454 = vmatprep.subr.bf16.mxu0 0
      %455 = vmatpush2.bf16.msra.mxu0 0
      %456 = vmatprep.subr.bf16.mxu0 0
      %457 = vmatpush2.bf16.msra.mxu0 0
      %458 = vmatprep.subr.bf16.mxu0 0
      %459 = vmatpush2.bf16.msra.mxu0 0
      %460 = vmatprep.subr.bf16.mxu0 0
      %461 = vmatpush2.bf16.msra.mxu0 0
      %462 = vmatprep.subr.bf16.mxu0 0
      %463 = vmatpush2.bf16.msra.mxu0 0
      %464 = vmatprep.subr.bf16.mxu0 0
      %465 = vmatpush2.bf16.msra.mxu0 0
      %466 = vmatprep.mubr.bf16.mxu0 0
      %467 = vmatmul.mubr.bf16.gmra.mxu0 %v429
      %v468 = vpop.f32.mrf.mxu0
      %v469 = vadd.f32 0.0, %v468
      %v470 = vpop.f32.mrf.mxu0
      %v471 = vpop.f32.mrf.mxu0
      %v472 = vadd.f32 0.0, %v471
      %v473 = vpop.f32.mrf.mxu0
      %474 = vmatprep.mubr.bf16.mxu0 0
      %475 = vmatmul.mubr.bf16.gmra.mxu0 %v432
      %v476 = vpop.f32.mrf.mxu0
      %v477 = vadd.f32 0.0, %v476
      %v478 = vpop.f32.mrf.mxu0
      %v479 = vpop.f32.mrf.mxu0
      %v480 = vadd.f32 0.0, %v479
      %v481 = vpop.f32.mrf.mxu0
      %482 = vdwg.mxu0
      %v483 = vadd.f32 %v367, %v469
      %v484 = vadd.f32 %v370, %v472
      %v485 = vadd.f32 %v375, %v477
      %v486 = vadd.f32 %v378, %v480
      %s487 = scalar_lea.vmem %s1, 96
      %v488 = vld [vmem:[%s487] sm:$0xf]
      %v489 = vld [vmem:[%s487 + $0x4] sm:$0xf]
      %v490 = vld [vmem:[%s487 + $0x8] sm:$0xf]
      %v491 = vld [vmem:[%s487 + $0xc] sm:$0xf]
      %v492 = vld [vmem:[%s487 + $0x10] sm:$0xf]
      %v493 = vld [vmem:[%s487 + $0x14] sm:$0xf]
      %v494 = vld [vmem:[%s487 + $0x18] sm:$0xf]
      %v495 = vld [vmem:[%s487 + $0x1c] sm:$0xf]
      %vm499 = vcmask 1044480
      %v500 = vrot.slane %v183, 3
      %v501 = vrot.slane %v184, 3
      %v502 = vsel %vm499, %v500, %v501
      %v503 = vrot.slane %v193, 3
      %v504 = vsel %vm499, %v501, %v503
      %v513 = vunpack.c.l.b16 %v488
      %v514 = vunpack.c.l.b16 %v489
      %v515 = vunpack.c.l.b16 %v490
      %v516 = vunpack.c.l.b16 %v491
      %v517 = vunpack.c.l.b16 %v492
      %v518 = vunpack.c.l.b16 %v493
      %v519 = vunpack.c.l.b16 %v494
      %v520 = vunpack.c.l.b16 %v495
      %v521 = vpack.c.b16 %v514, %v513
      %v522 = vpack.c.b16 %v516, %v515
      %v523 = vpack.c.b16 %v518, %v517
      %v524 = vpack.c.b16 %v520, %v519
      %v530 = vsel %vm248, %v502, 0
      %v533 = vsel %vm248, %v504, 0
      %535 = vmatprep.subr.bf16.mxu0 0
      %536 = vmatpush1.bf16.msra.mxu0 0
      %537 = vmatprep.subr.bf16.mxu0 0
      %538 = vmatpush1.bf16.msra.mxu0 0
      %539 = vmatprep.subr.bf16.mxu0 0
      %540 = vmatpush1.bf16.msra.mxu0 0
      %541 = vmatprep.subr.bf16.mxu0 0
      %542 = vmatpush1.bf16.msra.mxu0 0
      %543 = vmatprep.subr.bf16.mxu0 0
      %544 = vmatpush1.bf16.msra.mxu0 %v524
      %545 = vmatprep.subr.bf16.mxu0 0
      %546 = vmatpush1.bf16.msra.mxu0 %v523
      %547 = vmatprep.subr.bf16.mxu0 0
      %548 = vmatpush1.bf16.msra.mxu0 %v522
      %549 = vmatprep.subr.bf16.mxu0 0
      %550 = vmatpush1.bf16.msra.mxu0 %v521
      %551 = vmatprep.subr.bf16.mxu0 0
      %552 = vmatpush2.bf16.msra.mxu0 0
      %553 = vmatprep.subr.bf16.mxu0 0
      %554 = vmatpush2.bf16.msra.mxu0 0
      %555 = vmatprep.subr.bf16.mxu0 0
      %556 = vmatpush2.bf16.msra.mxu0 0
      %557 = vmatprep.subr.bf16.mxu0 0
      %558 = vmatpush2.bf16.msra.mxu0 0
      %559 = vmatprep.subr.bf16.mxu0 0
      %560 = vmatpush2.bf16.msra.mxu0 0
      %561 = vmatprep.subr.bf16.mxu0 0
      %562 = vmatpush2.bf16.msra.mxu0 0
      %563 = vmatprep.subr.bf16.mxu0 0
      %564 = vmatpush2.bf16.msra.mxu0 0
      %565 = vmatprep.subr.bf16.mxu0 0
      %566 = vmatpush2.bf16.msra.mxu0 0
      %567 = vmatprep.mubr.bf16.mxu0 0
      %568 = vmatmul.mubr.bf16.gmra.mxu0 %v530
      %v569 = vpop.f32.mrf.mxu0
      %v570 = vadd.f32 0.0, %v569
      %v571 = vpop.f32.mrf.mxu0
      %v572 = vpop.f32.mrf.mxu0
      %v573 = vadd.f32 0.0, %v572
      %v574 = vpop.f32.mrf.mxu0
      %575 = vmatprep.mubr.bf16.mxu0 0
      %576 = vmatmul.mubr.bf16.gmra.mxu0 %v533
      %v577 = vpop.f32.mrf.mxu0
      %v578 = vadd.f32 0.0, %v577
      %v579 = vpop.f32.mrf.mxu0
      %v580 = vpop.f32.mrf.mxu0
      %v581 = vadd.f32 0.0, %v580
      %v582 = vpop.f32.mrf.mxu0
      %583 = vdwg.mxu0
      %v584 = vadd.f32 %v483, %v570
      %v585 = vadd.f32 %v484, %v573
      %v586 = vadd.f32 %v485, %v578
      %v587 = vadd.f32 %v486, %v581
      %vm588 = vcmp.ge.f32.partialorder %v584, 0.0
      %vm589 = vcmp.ge.f32.partialorder %v585, 0.0
      %vm590 = vcmp.ge.f32.partialorder %v586, 0.0
      %vm591 = vcmp.ge.f32.partialorder %v587, 0.0
      %v592 = vmul.f32 %v584, 0.2
      %v593 = vmul.f32 %v585, 0.2
      %v594 = vmul.f32 %v586, 0.2
      %v595 = vmul.f32 %v587, 0.2
      %v596 = vsel %vm588, %v584, %v592
      %v597 = vsel %vm589, %v585, %v593
      %v598 = vsel %vm590, %v586, %v594
      %v599 = vsel %vm591, %v587, %v595
      %v600 = vpack.c.bf16 %v597, %v596
      %v601 = vpack.c.bf16 %v599, %v598
      %v604 = vunpack.c.l.b16 %v600
      %v605 = vunpack.c.h.b16 %v600
      %v606 = vunpack.c.l.b16 %v601
      %v607 = vunpack.c.h.b16 %v601
      %v608 = vpack.c.b16 %v604, %v604
      %v609 = vpack.c.b16 %v605, %v605
      %v610 = vpack.c.b16 %v606, %v606
      %v611 = vpack.c.b16 %v607, %v607
      %616 = vst [vmem:[%s165] sm:$0xf] %v608
      %617 = vst [vmem:[%s165 + $0x4] sm:$0xf] %v609
      %618 = vst [vmem:[%s165 + $0x8] sm:$0xf] %v610
      %619 = vst [vmem:[%s165 + $0xc] sm:$0xf] %v611
      %s620 = smul.u32 4, %s18
      %p621 = scmp.lt.s32.totalorder %s17, 1
      %s622 = scalar_select %p621, %s17, 1
      %p623 = scmp.lt.s32.totalorder %s620, 3
      %s624 = scalar_select %p623, %s620, 3
      %s625 = smul.addr %s622, 4
      %s626 = sadd.s32 %s624, %s625
      %s627 = smul.addr %s626, 4
      %s628 = scalar_lea.vmem %s2, %s627
      // Predicated region
      $region29: #{discriminator_forward.4} parent=27 // pred_check
        %p629 = pneg %p92
      $region30: #{discriminator_forward.4} parent=27 // pred_check_branch
        %631 = sbr.rel (%p629) target = $region32
      $region31: #{discriminator_forward.4} parent=27 // pred_region
        %s632 = smul.u32 4, %s18
      $region32: #{discriminator_forward.4} parent=27 // pred_fallthru
        _
    $region28: #{discriminator_forward.4} parent=5 // pred_fallthru
      _
    %p633 = scmp.le.s32.totalorder 2, %s8
    // Predicated region
    $region33: #{discriminator_forward.4} parent=5 // pred_check
      %p634 = pneg %p633
    $region34: #{discriminator_forward.4} parent=5 // pred_check_branch
      %636 = sbr.rel (%p634) target = $region36
    $region35: #{discriminator_forward.4} parent=5 // pred_region
      %s637 = ssub.s32 %s8, 2
      // Predicated region
      $region37: #{discriminator_forward.4} parent=35 // pred_check
        %p638 = pneg %p98
      $region38: #{discriminator_forward.4} parent=35 // pred_check_branch
        %640 = sbr.rel (%p638) target = $region40
      $region39: #{discriminator_forward.4} parent=35 // pred_region
        %s641 = smul.u32 4, %s20
        %p642 = scmp.lt.s32.totalorder %s19, 1
        %s643 = scalar_select %p642, %s19, 1
        %p644 = scmp.lt.s32.totalorder %s641, 3
        %s645 = scalar_select %p644, %s641, 3
        %s646 = smul.addr %s643, 4
        %s647 = sadd.s32 %s645, %s646
        %s648 = smul.addr %s647, 4
        %s649 = scalar_lea.vmem %s2, %s648
      $region40: #{discriminator_forward.4} parent=35 // pred_fallthru
        _
    $region36: #{discriminator_forward.4} parent=5 // pred_fallthru
      _
  $region6: #{discriminator_forward.4} parent=0 // loop_footer
    %s12 = sadd.s32 1, %s8
  $region7: #{discriminator_forward.4} parent=0 // loop_footer_branch
    %7 = sbr.rel target = $region3
  $region8: #{discriminator_forward.4} parent=0 // loop_exit
    _

// kernel: discriminator_forward.5
$region0: #{discriminator_forward.5}
  #allocation0 [shape = 'u32[]', space=smem, size = 0x4, offset = 0x4, fixed_abs, tag = 'smem constant byte address 0x4 - core index']
  #allocation1 [shape = 'u32[144,128]{1,0:T(1,128)}', space=vmem, size = 0x12000, scoped, tag = 'internal scratch']
  %s0 = inlined_call_operand.vmem [shape: bf16[2,32,128], index: 0, kind: input, shape index: {}]
  %s1 = inlined_call_operand.vmem [shape: bf16[4,128,128], index: 1, kind: input, shape index: {}]
  %s2 = inlined_call_operand.vmem [shape: f32[2,16,128], index: 2, kind: output, shape index: {}]
  %s3 = sld [smem:[#allocation0]]
  $region41: #{discriminator_forward.5} parent=0
    _
  %s5 = ssub.s32 1, %s3
  %s6 = scalar_select 0, %s5, %s3
  loop: start=0, step=1, limit=4
  $region2: #{discriminator_forward.5} parent=0 // loop_pre_header
    _
  $region3: #{discriminator_forward.5} parent=0 // loop_header
    %s8 = sphi 0, %s12
    %p9 = scmp.ge.s32.totalorder %s8, 4
    %s15 = sphi 0, %s27
    %s16 = sphi 0, %s23
    %s17 = sphi 0, %s15
    %s18 = sphi 0, %s16
    %s19 = sphi 0, %s17
    %s20 = sphi 0, %s18
    %s30 = sphi 0, %s32
    %s33 = sphi 0, %s30
    %s34 = sphi 0, %s33
    %s50 = sphi 0, %s34
    %s54 = sphi 0, %s54
    %s56 = sphi 0, %s54
    %s57 = sphi 0, %s56
    %s71 = sphi 0, %s57
    %s79 = sphi 0, %s81
    %s82 = sphi 0, %s79
    %s83 = sphi 0, %s82
    %s99 = sphi 0, %s83
  $region4: #{discriminator_forward.5} parent=0 // loop_header_branch
    %11 = sbr.rel (%p9) target = $region8
  $region5: #{discriminator_forward.5} parent=0 // loop_body
    %s13 = ssub.s32 %s8, 1
    %s14 = ssub.s32 %s8, 2
    %s21 = sadd.s32 1, %s16
    %p22 = scmp.ge.s32.totalorder %s21, 1
    %s23 = scalar_select %p22, 0, %s21
    %s24 = sadd.s32 1, %s15
    %s25 = scalar_select %p22, %s24, %s15
    %p26 = scmp.ge.s32.totalorder %s25, 2
    %s27 = scalar_select %p26, 0, %s25
    %s28 = ssub.s32 %s15, %s27
    %p29 = scmp.eq.s32.totalorder %s28, 0
    %s31 = sadd.s32 %s30, 1
    %s32 = scalar_select %p29, %s30, %s31
    %p35 = pneg %p29
    %p36 = scmp.eq.s32.totalorder %s8, 1
    %p37 = por %p35, %p36
    %p38 = scmp.ne.s32.totalorder %s30, %s33
    %p39 = scmp.eq.s32.totalorder %s8, 0
    %p40 = por %p38, %p39
    %p41 = scmp.ne.s32.totalorder %s30, %s33
    %p42 = scmp.eq.s32.totalorder %s13, 1
    %p43 = por %p41, %p42
    %p44 = scmp.ne.s32.totalorder %s33, %s34
    %p45 = scmp.eq.s32.totalorder %s13, 0
    %p46 = por %p44, %p45
    %p47 = scmp.ne.s32.totalorder %s33, %s34
    %p48 = scmp.eq.s32.totalorder %s14, 1
    %p49 = por %p47, %p48
    %p51 = scmp.ne.s32.totalorder %s34, %s50
    %p52 = scmp.eq.s32.totalorder %s14, 0
    %p53 = por %p51, %p52
    %s55 = sadd.s32 %s54, 1
    %p58 = scmp.eq.s32.totalorder %s8, 1
    %p59 = scmp.ne.s32.totalorder %s54, %s56
    %p60 = scmp.eq.s32.totalorder %s8, 0
    %p61 = por %p59, %p60
    %p62 = scmp.ne.s32.totalorder %s54, %s56
    %p63 = scmp.eq.s32.totalorder %s13, 1
    %p64 = por %p62, %p63
    %p65 = scmp.ne.s32.totalorder %s56, %s57
    %p66 = scmp.eq.s32.totalorder %s13, 0
    %p67 = por %p65, %p66
    %p68 = scmp.ne.s32.totalorder %s56, %s57
    %p69 = scmp.eq.s32.totalorder %s14, 1
    %p70 = por %p68, %p69
    %p72 = scmp.ne.s32.totalorder %s57, %s71
    %p73 = scmp.eq.s32.totalorder %s14, 0
    %p74 = por %p72, %p73
    %s75 = ssub.s32 %s15, %s27
    %s76 = ssub.s32 %s16, %s23
    %s77 = sor.u32 %s75, %s76
    %p78 = scmp.eq.s32.totalorder %s77, 0
    %s80 = sadd.s32 %s79, 1
    %s81 = scalar_select %p78, %s79, %s80
    %p84 = pneg %p78
    %p85 = scmp.eq.s32.totalorder %s8, 1
    %p86 = por %p84, %p85
    %p87 = scmp.ne.s32.totalorder %s79, %s82
    %p88 = scmp.eq.s32.totalorder %s8, 0
    %p89 = por %p87, %p88
    %p90 = scmp.ne.s32.totalorder %s79, %s82
    %p91 = scmp.eq.s32.totalorder %s13, 1
    %p92 = por %p90, %p91
    %p93 = scmp.ne.s32.totalorder %s82, %s83
    %p94 = scmp.eq.s32.totalorder %s13, 0
    %p95 = por %p93, %p94
    %p96 = scmp.ne.s32.totalorder %s82, %s83
    %p97 = scmp.eq.s32.totalorder %s14, 1
    %p98 = por %p96, %p97
    %p100 = scmp.ne.s32.totalorder %s83, %s99
    %p101 = scmp.eq.s32.totalorder %s14, 0
    %p102 = por %p100, %p101
    %p103 = scmp.le.s32.totalorder 1, %s8
    %p104 = scmp.lt.s32.totalorder %s8, 3
    %p105 = pnand %p103, %p104
    %p106 = pneg %p105
    // Predicated region
    $region9: #{discriminator_forward.5} parent=5 // pred_check
      _
    $region10: #{discriminator_forward.5} parent=5 // pred_check_branch
      %108 = sbr.rel (%p105) target = $region12
    $region11: #{discriminator_forward.5} parent=5 // pred_region
      %s109 = ssub.s32 %s8, 1
      // Predicated region
      $region13: #{discriminator_forward.5} parent=11 // pred_check
        %p110 = pneg %p67
      $region14: #{discriminator_forward.5} parent=11 // pred_check_branch
        %112 = sbr.rel (%p110) target = $region16
      $region15: #{discriminator_forward.5} parent=11 // pred_region
        _
      $region16: #{discriminator_forward.5} parent=11 // pred_fallthru
        _
    $region12: #{discriminator_forward.5} parent=5 // pred_fallthru
      _
    %p113 = scmp.lt.s32.totalorder %s8, 2
    // Predicated region
    $region17: #{discriminator_forward.5} parent=5 // pred_check
      %p114 = pneg %p113
    $region18: #{discriminator_forward.5} parent=5 // pred_check_branch
      %116 = sbr.rel (%p114) target = $region20
    $region19: #{discriminator_forward.5} parent=5 // pred_region
      // Predicated region
      $region21: #{discriminator_forward.5} parent=19 // pred_check
        %p117 = pneg %p40
      $region22: #{discriminator_forward.5} parent=19 // pred_check_branch
        %119 = sbr.rel (%p117) target = $region24
      $region23: #{discriminator_forward.5} parent=19 // pred_region
        %p120 = scmp.lt.s32.totalorder %s15, 1
        %s121 = scalar_select %p120, %s15, 1
        %s122 = smul.addr %s121, 4
        %s123 = smul.addr %s122, 4
        %s124 = scalar_lea.vmem %s0, %s123
      $region24: #{discriminator_forward.5} parent=19 // pred_fallthru
        _
    $region20: #{discriminator_forward.5} parent=5 // pred_fallthru
      _
    %p125 = scmp.le.s32.totalorder 1, %s8
    %p126 = scmp.lt.s32.totalorder %s8, 3
    %p127 = pnand %p125, %p126
    %p128 = pneg %p127
    // Predicated region
    $region25: #{discriminator_forward.5} parent=5 // pred_check
      _
    $region26: #{discriminator_forward.5} parent=5 // pred_check_branch
      %130 = sbr.rel (%p127) target = $region28
    $region27: #{discriminator_forward.5} parent=5 // pred_region
      %s131 = ssub.s32 %s8, 1
      %p132 = scmp.lt.s32.totalorder %s17, 1
      %s133 = scalar_select %p132, %s17, 1
      %s134 = smul.addr %s133, 4
      %s135 = smul.addr %s134, 4
      %s136 = scalar_lea.vmem %s0, %s135
      %p137 = pneg %p46
      %p138 = pneg %p43
      %p139 = pneg %p67
      %p140 = pneg %p64
      %p141 = pneg %p95
      %p142 = pneg %p92
      %s143 = smul.u32 2, %s18
      %p144 = scmp.lt.s32.totalorder %s17, 1
      %s145 = scalar_select %p144, %s17, 1
      %p146 = scmp.lt.s32.totalorder %s143, 1
      %s147 = scalar_select %p146, %s143, 1
      %s148 = smul.addr %s145, 2
      %s149 = sadd.s32 %s147, %s148
      %s150 = smul.addr %s149, 8
      %s151 = scalar_lea.vmem %s2, %s150
      %p152 = scmp.lt.s32.totalorder %s17, 1
      %s153 = scalar_select %p152, %s17, 1
      %s154 = smul.addr %s153, 4
      %s155 = smul.addr %s154, 4
      %s156 = scalar_lea.vmem %s0, %s155
      %s157 = smul.u32 2, %s18
      %p158 = scmp.lt.s32.totalorder %s17, 1
      %s159 = scalar_select %p158, %s17, 1
      %p160 = scmp.lt.s32.totalorder %s157, 1
      %s161 = scalar_select %p160, %s157, 1
      %s162 = smul.addr %s159, 2
      %s163 = sadd.s32 %s161, %s162
      %s164 = smul.addr %s163, 8
      %s165 = scalar_lea.vmem %s2, %s164
      %s166 = smul.u32 2, %s18
      %s168 = smul.u32 %s18, 16
      %s169 = sshra.s32 %s168, 3
      %s170 = sand.u32 %s168, 7
      %s171 = smul.addr %s169, 4
      %s172 = scalar_lea.vmem %s156, %s171
      %v173 = vld [vmem:[%s172] sm:$0xf]
      %v174 = vld [vmem:[%s172 + $0x4] sm:$0xf]
      %v175 = vld [vmem:[%s172 + $0x8] sm:$0xf]
      %v176 = vunpack.c.l.bf16 %v173
      %v177 = vunpack.c.l.bf16 %v174
      %v178 = vunpack.c.l.bf16 %v175
      %v179 = vpack.c.bf16 %v177, %v176
      %v180 = vld [vmem:[%s1] sm:$0xf]
      %v181 = vld [vmem:[%s1 + $0x4] sm:$0xf]
      %v182 = vld [vmem:[%s1 + $0x8] sm:$0xf]
      %v183 = vld [vmem:[%s1 + $0xc] sm:$0xf]
      %v184 = vld [vmem:[%s1 + $0x10] sm:$0xf]
      %v185 = vld [vmem:[%s1 + $0x14] sm:$0xf]
      %v186 = vld [vmem:[%s1 + $0x18] sm:$0xf]
      %v187 = vld [vmem:[%s1 + $0x1c] sm:$0xf]
      %v188 = vld [vmem:[%s1 + $0x20] sm:$0xf]
      %v189 = vld [vmem:[%s1 + $0x24] sm:$0xf]
      %v190 = vld [vmem:[%s1 + $0x28] sm:$0xf]
      %v191 = vld [vmem:[%s1 + $0x2c] sm:$0xf]
      %v192 = vld [vmem:[%s1 + $0x30] sm:$0xf]
      %v193 = vld [vmem:[%s1 + $0x34] sm:$0xf]
      %v194 = vld [vmem:[%s1 + $0x38] sm:$0xf]
      %v195 = vld [vmem:[%s1 + $0x3c] sm:$0xf]
      %v196 = vpack.c.bf16 %v178, %v178
      %s197 = scalar_lea.vmem %s1, 64
      %v198 = vld [vmem:[%s197] sm:$0xf]
      %v199 = vld [vmem:[%s197 + $0x4] sm:$0xf]
      %v200 = vld [vmem:[%s197 + $0x8] sm:$0xf]
      %v201 = vld [vmem:[%s197 + $0xc] sm:$0xf]
      %v202 = vld [vmem:[%s197 + $0x10] sm:$0xf]
      %v203 = vld [vmem:[%s197 + $0x14] sm:$0xf]
      %v204 = vld [vmem:[%s197 + $0x18] sm:$0xf]
      %v205 = vld [vmem:[%s197 + $0x1c] sm:$0xf]
      %v206 = vld [vmem:[%s197 + $0x20] sm:$0xf]
      %v207 = vld [vmem:[%s197 + $0x24] sm:$0xf]
      %v208 = vld [vmem:[%s197 + $0x28] sm:$0xf]
      %v209 = vld [vmem:[%s197 + $0x2c] sm:$0xf]
      %v210 = vld [vmem:[%s197 + $0x30] sm:$0xf]
      %v211 = vld [vmem:[%s197 + $0x34] sm:$0xf]
      %v212 = vld [vmem:[%s197 + $0x38] sm:$0xf]
      %v213 = vld [vmem:[%s197 + $0x3c] sm:$0xf]
      %vm214 = vsmask.f32 7424
      %v216 = vshrl.u32 %v179, 16
      %v218 = vshll.u32 %v179, 16
      %v220 = vrot.slane %v218, 1
      %v221 = vor.u32 %v216, %v220
      %v223 = vshll.u32 %v196, 16
      %v225 = vrot.slane %v223, 1
      %v226 = vsel %vm214, %v221, %v225
      %v244 = vunpack.c.l.b16 %v198
      %v245 = vunpack.c.l.b16 %v199
      %v246 = vunpack.c.l.b16 %v200
      %v247 = vunpack.c.l.b16 %v201
      %v248 = vunpack.c.l.b16 %v202
      %v249 = vunpack.c.l.b16 %v203
      %v250 = vunpack.c.l.b16 %v204
      %v251 = vunpack.c.l.b16 %v205
      %v252 = vunpack.c.l.b16 %v206
      %v253 = vunpack.c.l.b16 %v207
      %v254 = vunpack.c.l.b16 %v208
      %v255 = vunpack.c.l.b16 %v209
      %v256 = vunpack.c.l.b16 %v210
      %v257 = vunpack.c.l.b16 %v211
      %v258 = vunpack.c.l.b16 %v212
      %v259 = vunpack.c.l.b16 %v213
      %v260 = vpack.c.b16 %v245, %v244
      %v261 = vpack.c.b16 %v247, %v246
      %v262 = vpack.c.b16 %v249, %v248
      %v263 = vpack.c.b16 %v251, %v250
      %v264 = vpack.c.b16 %v253, %v252
      %v265 = vpack.c.b16 %v255, %v254
      %v266 = vpack.c.b16 %v257, %v256
      %v267 = vpack.c.b16 %v259, %v258
      %276 = vmatprep.subr.bf16.mxu0 0
      %277 = vmatpush1.bf16.msra.mxu0 %v267
      %278 = vmatprep.subr.bf16.mxu0 0
      %279 = vmatpush1.bf16.msra.mxu0 %v266
      %280 = vmatprep.subr.bf16.mxu0 0
      %281 = vmatpush1.bf16.msra.mxu0 %v265
      %282 = vmatprep.subr.bf16.mxu0 0
      %283 = vmatpush1.bf16.msra.mxu0 %v264
      %284 = vmatprep.subr.bf16.mxu0 0
      %285 = vmatpush1.bf16.msra.mxu0 %v263
      %286 = vmatprep.subr.bf16.mxu0 0
      %287 = vmatpush1.bf16.msra.mxu0 %v262
      %288 = vmatprep.subr.bf16.mxu0 0
      %289 = vmatpush1.bf16.msra.mxu0 %v261
      %290 = vmatprep.subr.bf16.mxu0 0
      %291 = vmatpush1.bf16.msra.mxu0 %v260
      %292 = vmatprep.subr.bf16.mxu0 0
      %293 = vmatpush2.bf16.msra.mxu0 0
      %294 = vmatprep.subr.bf16.mxu0 0
      %295 = vmatpush2.bf16.msra.mxu0 0
      %296 = vmatprep.subr.bf16.mxu0 0
      %297 = vmatpush2.bf16.msra.mxu0 0
      %298 = vmatprep.subr.bf16.mxu0 0
      %299 = vmatpush2.bf16.msra.mxu0 0
      %300 = vmatprep.subr.bf16.mxu0 0
      %301 = vmatpush2.bf16.msra.mxu0 0
      %302 = vmatprep.subr.bf16.mxu0 0
      %303 = vmatpush2.bf16.msra.mxu0 0
      %304 = vmatprep.subr.bf16.mxu0 0
      %305 = vmatpush2.bf16.msra.mxu0 0
      %306 = vmatprep.subr.bf16.mxu0 0
      %307 = vmatpush2.bf16.msra.mxu0 0
      %308 = vmatprep.mubr.bf16.mxu0 0
      %309 = vmatmul.mubr.bf16.gmra.mxu0 %v226
      %v310 = vpop.f32.mrf.mxu0
      %v311 = vadd.f32 0.0, %v310
      %v312 = vpop.f32.mrf.mxu0
      %v313 = vpop.f32.mrf.mxu0
      %v314 = vadd.f32 0.0, %v313
      %v315 = vpop.f32.mrf.mxu0
      %316 = vdwg.mxu0
      %v333 = vunpack.c.l.b16 %v180
      %v334 = vunpack.c.l.b16 %v181
      %v335 = vunpack.c.l.b16 %v182
      %v336 = vunpack.c.l.b16 %v183
      %v337 = vunpack.c.l.b16 %v184
      %v338 = vunpack.c.l.b16 %v185
      %v339 = vunpack.c.l.b16 %v186
      %v340 = vunpack.c.l.b16 %v187
      %v341 = vunpack.c.l.b16 %v188
      %v342 = vunpack.c.l.b16 %v189
      %v343 = vunpack.c.l.b16 %v190
      %v344 = vunpack.c.l.b16 %v191
      %v345 = vunpack.c.l.b16 %v192
      %v346 = vunpack.c.l.b16 %v193
      %v347 = vunpack.c.l.b16 %v194
      %v348 = vunpack.c.l.b16 %v195
      %v349 = vpack.c.b16 %v334, %v333
      %v350 = vpack.c.b16 %v336, %v335
      %v351 = vpack.c.b16 %v338, %v337
      %v352 = vpack.c.b16 %v340, %v339
      %v353 = vpack.c.b16 %v342, %v341
      %v354 = vpack.c.b16 %v344, %v343
      %v355 = vpack.c.b16 %v346, %v345
      %v356 = vpack.c.b16 %v348, %v347
      %365 = vmatprep.subr.bf16.mxu0 0
      %366 = vmatpush1.bf16.msra.mxu0 %v356
      %367 = vmatprep.subr.bf16.mxu0 0
      %368 = vmatpush1.bf16.msra.mxu0 %v355
      %369 = vmatprep.subr.bf16.mxu0 0
      %370 = vmatpush1.bf16.msra.mxu0 %v354
      %371 = vmatprep.subr.bf16.mxu0 0
      %372 = vmatpush1.bf16.msra.mxu0 %v353
      %373 = vmatprep.subr.bf16.mxu0 0
      %374 = vmatpush1.bf16.msra.mxu0 %v352
      %375 = vmatprep.subr.bf16.mxu0 0
      %376 = vmatpush1.bf16.msra.mxu0 %v351
      %377 = vmatprep.subr.bf16.mxu0 0
      %378 = vmatpush1.bf16.msra.mxu0 %v350
      %379 = vmatprep.subr.bf16.mxu0 0
      %380 = vmatpush1.bf16.msra.mxu0 %v349
      %381 = vmatprep.subr.bf16.mxu0 0
      %382 = vmatpush2.bf16.msra.mxu0 0
      %383 = vmatprep.subr.bf16.mxu0 0
      %384 = vmatpush2.bf16.msra.mxu0 0
      %385 = vmatprep.subr.bf16.mxu0 0
      %386 = vmatpush2.bf16.msra.mxu0 0
      %387 = vmatprep.subr.bf16.mxu0 0
      %388 = vmatpush2.bf16.msra.mxu0 0
      %389 = vmatprep.subr.bf16.mxu0 0
      %390 = vmatpush2.bf16.msra.mxu0 0
      %391 = vmatprep.subr.bf16.mxu0 0
      %392 = vmatpush2.bf16.msra.mxu0 0
      %393 = vmatprep.subr.bf16.mxu0 0
      %394 = vmatpush2.bf16.msra.mxu0 0
      %395 = vmatprep.subr.bf16.mxu0 0
      %396 = vmatpush2.bf16.msra.mxu0 0
      %397 = vmatprep.mubr.bf16.mxu0 0
      %398 = vmatmul.mubr.bf16.gmra.mxu0 %v179
      %v399 = vpop.f32.mrf.mxu0
      %v400 = vadd.f32 %v311, %v399
      %v401 = vpop.f32.mrf.mxu0
      %v402 = vpop.f32.mrf.mxu0
      %v403 = vadd.f32 %v314, %v402
      %v404 = vpop.f32.mrf.mxu0
      %405 = vdwg.mxu0
      %s406 = scalar_lea.vmem %s1, 128
      %v407 = vld [vmem:[%s406] sm:$0xf]
      %v408 = vld [vmem:[%s406 + $0x4] sm:$0xf]
      %v409 = vld [vmem:[%s406 + $0x8] sm:$0xf]
      %v410 = vld [vmem:[%s406 + $0xc] sm:$0xf]
      %v411 = vld [vmem:[%s406 + $0x10] sm:$0xf]
      %v412 = vld [vmem:[%s406 + $0x14] sm:$0xf]
      %v413 = vld [vmem:[%s406 + $0x18] sm:$0xf]
      %v414 = vld [vmem:[%s406 + $0x1c] sm:$0xf]
      %v415 = vld [vmem:[%s406 + $0x20] sm:$0xf]
      %v416 = vld [vmem:[%s406 + $0x24] sm:$0xf]
      %v417 = vld [vmem:[%s406 + $0x28] sm:$0xf]
      %v418 = vld [vmem:[%s406 + $0x2c] sm:$0xf]
      %v419 = vld [vmem:[%s406 + $0x30] sm:$0xf]
      %v420 = vld [vmem:[%s406 + $0x34] sm:$0xf]
      %v421 = vld [vmem:[%s406 + $0x38] sm:$0xf]
      %v422 = vld [vmem:[%s406 + $0x3c] sm:$0xf]
      %vm423 = vsmask.f32 6400
      %v424 = vrot.slane %v216, 1
      %v425 = vrot.slane %v218, 2
      %v426 = vor.u32 %v424, %v425
      %v427 = vshrl.u32 %v196, 16
      %v429 = vrot.slane %v427, 1
      %v430 = vrot.slane %v223, 2
      %v431 = vor.u32 %v429, %v430
      %v432 = vsel %vm423, %v426, %v431
      %v450 = vunpack.c.l.b16 %v407
      %v451 = vunpack.c.l.b16 %v408
      %v452 = vunpack.c.l.b16 %v409
      %v453 = vunpack.c.l.b16 %v410
      %v454 = vunpack.c.l.b16 %v411
      %v455 = vunpack.c.l.b16 %v412
      %v456 = vunpack.c.l.b16 %v413
      %v457 = vunpack.c.l.b16 %v414
      %v458 = vunpack.c.l.b16 %v415
      %v459 = vunpack.c.l.b16 %v416
      %v460 = vunpack.c.l.b16 %v417
      %v461 = vunpack.c.l.b16 %v418
      %v462 = vunpack.c.l.b16 %v419
      %v463 = vunpack.c.l.b16 %v420
      %v464 = vunpack.c.l.b16 %v421
      %v465 = vunpack.c.l.b16 %v422
      %v466 = vpack.c.b16 %v451, %v450
      %v467 = vpack.c.b16 %v453, %v452
      %v468 = vpack.c.b16 %v455, %v454
      %v469 = vpack.c.b16 %v457, %v456
      %v470 = vpack.c.b16 %v459, %v458
      %v471 = vpack.c.b16 %v461, %v460
      %v472 = vpack.c.b16 %v463, %v462
      %v473 = vpack.c.b16 %v465, %v464
      %482 = vmatprep.subr.bf16.mxu0 0
      %483 = vmatpush1.bf16.msra.mxu0 %v473
      %484 = vmatprep.subr.bf16.mxu0 0
      %485 = vmatpush1.bf16.msra.mxu0 %v472
      %486 = vmatprep.subr.bf16.mxu0 0
      %487 = vmatpush1.bf16.msra.mxu0 %v471
      %488 = vmatprep.subr.bf16.mxu0 0
      %489 = vmatpush1.bf16.msra.mxu0 %v470
      %490 = vmatprep.subr.bf16.mxu0 0
      %491 = vmatpush1.bf16.msra.mxu0 %v469
      %492 = vmatprep.subr.bf16.mxu0 0
      %493 = vmatpush1.bf16.msra.mxu0 %v468
      %494 = vmatprep.subr.bf16.mxu0 0
      %495 = vmatpush1.bf16.msra.mxu0 %v467
      %496 = vmatprep.subr.bf16.mxu0 0
      %497 = vmatpush1.bf16.msra.mxu0 %v466
      %498 = vmatprep.subr.bf16.mxu0 0
      %499 = vmatpush2.bf16.msra.mxu0 0
      %500 = vmatprep.subr.bf16.mxu0 0
      %501 = vmatpush2.bf16.msra.mxu0 0
      %502 = vmatprep.subr.bf16.mxu0 0
      %503 = vmatpush2.bf16.msra.mxu0 0
      %504 = vmatprep.subr.bf16.mxu0 0
      %505 = vmatpush2.bf16.msra.mxu0 0
      %506 = vmatprep.subr.bf16.mxu0 0
      %507 = vmatpush2.bf16.msra.mxu0 0
      %508 = vmatprep.subr.bf16.mxu0 0
      %509 = vmatpush2.bf16.msra.mxu0 0
      %510 = vmatprep.subr.bf16.mxu0 0
      %511 = vmatpush2.bf16.msra.mxu0 0
      %512 = vmatprep.subr.bf16.mxu0 0
      %513 = vmatpush2.bf16.msra.mxu0 0
      %514 = vmatprep.mubr.bf16.mxu0 0
      %515 = vmatmul.mubr.bf16.gmra.mxu0 %v432
      %v516 = vpop.f32.mrf.mxu0
      %v517 = vadd.f32 0.0, %v516
      %v518 = vpop.f32.mrf.mxu0
      %v519 = vpop.f32.mrf.mxu0
      %v520 = vadd.f32 0.0, %v519
      %v521 = vpop.f32.mrf.mxu0
      %522 = vdwg.mxu0
      %v523 = vadd.f32 %v400, %v517
      %v524 = vadd.f32 %v403, %v520
      %s525 = scalar_lea.vmem %s1, 192
      %v526 = vld [vmem:[%s525] sm:$0xf]
      %v527 = vld [vmem:[%s525 + $0x4] sm:$0xf]
      %v528 = vld [vmem:[%s525 + $0x8] sm:$0xf]
      %v529 = vld [vmem:[%s525 + $0xc] sm:$0xf]
      %v530 = vld [vmem:[%s525 + $0x10] sm:$0xf]
      %v531 = vld [vmem:[%s525 + $0x14] sm:$0xf]
      %v532 = vld [vmem:[%s525 + $0x18] sm:$0xf]
      %v533 = vld [vmem:[%s525 + $0x1c] sm:$0xf]
      %v534 = vld [vmem:[%s525 + $0x20] sm:$0xf]
      %v535 = vld [vmem:[%s525 + $0x24] sm:$0xf]
      %v536 = vld [vmem:[%s525 + $0x28] sm:$0xf]
      %v537 = vld [vmem:[%s525 + $0x2c] sm:$0xf]
      %v538 = vld [vmem:[%s525 + $0x30] sm:$0xf]
      %v539 = vld [vmem:[%s525 + $0x34] sm:$0xf]
      %v540 = vld [vmem:[%s525 + $0x38] sm:$0xf]
      %v541 = vld [vmem:[%s525 + $0x3c] sm:$0xf]
      %vm544 = vcmask 1045504
      %v545 = vrot.slane %v179, 2
      %v546 = vrot.slane %v196, 2
      %v547 = vsel %vm544, %v545, %v546
      %v565 = vunpack.c.l.b16 %v526
      %v566 = vunpack.c.l.b16 %v527
      %v567 = vunpack.c.l.b16 %v528
      %v568 = vunpack.c.l.b16 %v529
      %v569 = vunpack.c.l.b16 %v530
      %v570 = vunpack.c.l.b16 %v531
      %v571 = vunpack.c.l.b16 %v532
      %v572 = vunpack.c.l.b16 %v533
      %v573 = vunpack.c.l.b16 %v534
      %v574 = vunpack.c.l.b16 %v535
      %v575 = vunpack.c.l.b16 %v536
      %v576 = vunpack.c.l.b16 %v537
      %v577 = vunpack.c.l.b16 %v538
      %v578 = vunpack.c.l.b16 %v539
      %v579 = vunpack.c.l.b16 %v540
      %v580 = vunpack.c.l.b16 %v541
      %v581 = vpack.c.b16 %v566, %v565
      %v582 = vpack.c.b16 %v568, %v567
      %v583 = vpack.c.b16 %v570, %v569
      %v584 = vpack.c.b16 %v572, %v571
      %v585 = vpack.c.b16 %v574, %v573
      %v586 = vpack.c.b16 %v576, %v575
      %v587 = vpack.c.b16 %v578, %v577
      %v588 = vpack.c.b16 %v580, %v579
      %597 = vmatprep.subr.bf16.mxu0 0
      %598 = vmatpush1.bf16.msra.mxu0 %v588
      %599 = vmatprep.subr.bf16.mxu0 0
      %600 = vmatpush1.bf16.msra.mxu0 %v587
      %601 = vmatprep.subr.bf16.mxu0 0
      %602 = vmatpush1.bf16.msra.mxu0 %v586
      %603 = vmatprep.subr.bf16.mxu0 0
      %604 = vmatpush1.bf16.msra.mxu0 %v585
      %605 = vmatprep.subr.bf16.mxu0 0
      %606 = vmatpush1.bf16.msra.mxu0 %v584
      %607 = vmatprep.subr.bf16.mxu0 0
      %608 = vmatpush1.bf16.msra.mxu0 %v583
      %609 = vmatprep.subr.bf16.mxu0 0
      %610 = vmatpush1.bf16.msra.mxu0 %v582
      %611 = vmatprep.subr.bf16.mxu0 0
      %612 = vmatpush1.bf16.msra.mxu0 %v581
      %613 = vmatprep.subr.bf16.mxu0 0
      %614 = vmatpush2.bf16.msra.mxu0 0
      %615 = vmatprep.subr.bf16.mxu0 0
      %616 = vmatpush2.bf16.msra.mxu0 0
      %617 = vmatprep.subr.bf16.mxu0 0
      %618 = vmatpush2.bf16.msra.mxu0 0
      %619 = vmatprep.subr.bf16.mxu0 0
      %620 = vmatpush2.bf16.msra.mxu0 0
      %621 = vmatprep.subr.bf16.mxu0 0
      %622 = vmatpush2.bf16.msra.mxu0 0
      %623 = vmatprep.subr.bf16.mxu0 0
      %624 = vmatpush2.bf16.msra.mxu0 0
      %625 = vmatprep.subr.bf16.mxu0 0
      %626 = vmatpush2.bf16.msra.mxu0 0
      %627 = vmatprep.subr.bf16.mxu0 0
      %628 = vmatpush2.bf16.msra.mxu0 0
      %629 = vmatprep.mubr.bf16.mxu0 0
      %630 = vmatmul.mubr.bf16.gmra.mxu0 %v547
      %v631 = vpop.f32.mrf.mxu0
      %v632 = vadd.f32 0.0, %v631
      %v633 = vpop.f32.mrf.mxu0
      %v634 = vpop.f32.mrf.mxu0
      %v635 = vadd.f32 0.0, %v634
      %v636 = vpop.f32.mrf.mxu0
      %637 = vdwg.mxu0
      %v638 = vadd.f32 %v523, %v632
      %v639 = vadd.f32 %v524, %v635
      %640 = vst [vmem:[%s165] sm:$0xff] %v638
      %641 = vst [vmem:[%s165 + $0x8] sm:$0xff] %v639
      %s642 = smul.u32 2, %s18
      %p643 = scmp.lt.s32.totalorder %s17, 1
      %s644 = scalar_select %p643, %s17, 1
      %p645 = scmp.lt.s32.totalorder %s642, 1
      %s646 = scalar_select %p645, %s642, 1
      %s647 = smul.addr %s644, 2
      %s648 = sadd.s32 %s646, %s647
      %s649 = smul.addr %s648, 8
      %s650 = scalar_lea.vmem %s2, %s649
      // Predicated region
      $region29: #{discriminator_forward.5} parent=27 // pred_check
        %p651 = pneg %p92
      $region30: #{discriminator_forward.5} parent=27 // pred_check_branch
        %653 = sbr.rel (%p651) target = $region32
      $region31: #{discriminator_forward.5} parent=27 // pred_region
        %s654 = smul.u32 2, %s18
      $region32: #{discriminator_forward.5} parent=27 // pred_fallthru
        _
    $region28: #{discriminator_forward.5} parent=5 // pred_fallthru
      _
    %p655 = scmp.le.s32.totalorder 2, %s8
    // Predicated region
    $region33: #{discriminator_forward.5} parent=5 // pred_check
      %p656 = pneg %p655
    $region34: #{discriminator_forward.5} parent=5 // pred_check_branch
      %658 = sbr.rel (%p656) target = $region36
    $region35: #{discriminator_forward.5} parent=5 // pred_region
      %s659 = ssub.s32 %s8, 2
      // Predicated region
      $region37: #{discriminator_forward.5} parent=35 // pred_check
        %p660 = pneg %p98
      $region38: #{discriminator_forward.5} parent=35 // pred_check_branch
        %662 = sbr.rel (%p660) target = $region40
      $region39: #{discriminator_forward.5} parent=35 // pred_region
        %s663 = smul.u32 2, %s20
        %p664 = scmp.lt.s32.totalorder %s19, 1
        %s665 = scalar_select %p664, %s19, 1
        %p666 = scmp.lt.s32.totalorder %s663, 1
        %s667 = scalar_select %p666, %s663, 1
        %s668 = smul.addr %s665, 2
        %s669 = sadd.s32 %s667, %s668
        %s670 = smul.addr %s669, 8
        %s671 = scalar_lea.vmem %s2, %s670
      $region40: #{discriminator_forward.5} parent=35 // pred_fallthru
        _
    $region36: #{discriminator_forward.5} parent=5 // pred_fallthru
      _
  $region6: #{discriminator_forward.5} parent=0 // loop_footer
    %s12 = sadd.s32 1, %s8
  $region7: #{discriminator_forward.5} parent=0 // loop_footer_branch
    %7 = sbr.rel target = $region3
  $region8: #{discriminator_forward.5} parent=0 // loop_exit
    _

</llo_original>
